<compile_context>
chip_gen: v7x
topology: tpu7x:2x2x1
jax: 0.10.0
libtpu: 0.0.40
codegen_flags: <defaults>
</compile_context>

<pallas_src>
import jax
import jax.numpy as jnp
from jax import lax
from jax.experimental import pallas as pl
from jax.experimental.pallas import tpu as pltpu

K1, K2 = 3, 32              # original conv kernel sizes
C1, C2 = 10, 20             # conv channel counts
KE = K1 + K2 - 1            # fused conv kernel size = 34
POOL = 512                  # MaxPool1d kernel == stride
LANE = 128


def _onedcnn_kernel(x_ref, w_ref, b_ref, out_ref):
    TB = x_ref.shape[0]
    n_pool = out_ref.shape[2]
    T2u = n_pool * POOL                 # conv outputs that survive MaxPool1d(512,512)

    w = w_ref[...]                      # (C2, KE) fused conv weights
    b = b_ref[...]                      # (C2, 1)  fused bias

    def body(s, carry):
        xr = x_ref[s]                   # (1, L) current sample (leading-dim index)

        # Fused Conv1d(1 -> C2, kernel=KE, stride=1, valid): KE broadcast tap-MACs (VPU).
        acc = jnp.zeros((C2, T2u), jnp.float32)
        for k in range(KE):
            acc = acc + w[:, k:k + 1] * xr[:, k:k + T2u]

        # MaxPool1d(POOL, POOL), staged: VPU max over 128-lane tiles, one XLU lane reduce.
        cols = []
        for p in range(n_pool):
            wnd = acc[:, p * POOL:(p + 1) * POOL]          # lane-aligned window
            m = wnd[:, 0:LANE]
            for j in range(1, POOL // LANE):
                m = jnp.maximum(m, wnd[:, j * LANE:(j + 1) * LANE])
            cols.append(jnp.max(m, axis=-1, keepdims=True))   # (C2, 1)
        pooled = cols[0] if n_pool == 1 else jnp.concatenate(cols, axis=1)

        out_ref[s] = pooled + b          # (C2, n_pool); bias folded in after the max
        return carry

    lax.fori_loop(0, TB, body, 0)


def _round_up(n, m):
    return ((n + m - 1) // m) * m


def oned_cnn_pre(x, w1, b1, w2, b2, *, block_b=None):
    """x: (B,1,L) f32; w1: (C1,1,K1); b1: (C1,); w2: (C2,C1,K2); b2: (C2,) -> (B, C2*n_pool)."""
    B, Cin, L = x.shape
    assert Cin == 1
    T2 = L - KE + 1
    n_pool = T2 // POOL
    assert n_pool >= 1, "input too short for MaxPool1d(512)"
    F = C2 * n_pool

    # --- fuse conv1 o conv2 into a single (C2, KE) conv + bias (done once, in the wrapper) ---
    w1s = w1[:, 0, :].astype(jnp.float32)            # (C1, K1)
    w2f = w2.astype(jnp.float32)                     # (C2, C1, K2)
    w_eff = jnp.zeros((C2, KE), jnp.float32)
    for a in range(K1):
        w_eff = w_eff.at[:, a:a + K2].add(jnp.einsum("i,cik->ck", w1s[:, a], w2f))
    b_eff = b2.astype(jnp.float32) + jnp.einsum("cik,i->c", w2f, b1.astype(jnp.float32))
    b_eff = b_eff.reshape(C2, 1)

    # --- batch blocking: TB samples per grid step ---
    if block_b is None:
        block_b = min(16, _round_up(B, 8))
    TB = block_b
    B_pad = _round_up(B, TB)
    x3 = x.astype(jnp.float32)
    if B_pad != B:
        x3 = jnp.pad(x3, ((0, B_pad - B), (0, 0), (0, 0)))

    out = pl.pallas_call(
        _onedcnn_kernel,
        out_shape=jax.ShapeDtypeStruct((B_pad, C2, n_pool), jnp.float32),
        grid_spec=pltpu.PrefetchScalarGridSpec(
            num_scalar_prefetch=0,
            grid=(B_pad // TB,),
            in_specs=[
                pl.BlockSpec((TB, 1, L), lambda i: (i, 0, 0)),
                pl.BlockSpec((C2, KE), lambda i: (0, 0)),
                pl.BlockSpec((C2, 1), lambda i: (0, 0)),
            ],
            out_specs=pl.BlockSpec((TB, C2, n_pool), lambda i: (i, 0, 0)),
        ),
        compiler_params=pltpu.CompilerParams(
            dimension_semantics=("parallel",)),
    )(x3, w_eff, b_eff)

    return out[:B].reshape(B, F)


def _ref_forward(x, w1, b1, w2, b2):
    """Pure-JAX reference matching the PyTorch forward."""
    dn = ("NCH", "OIH", "NCH")
    h1 = jax.lax.conv_general_dilated(x, w1, (1,), "VALID", dimension_numbers=dn)
    h1 = h1 + b1[None, :, None]
    h2 = jax.lax.conv_general_dilated(h1, w2, (1,), "VALID", dimension_numbers=dn)
    h2 = h2 + b2[None, :, None]
    B, C, T2 = h2.shape
    n_pool = T2 // POOL
    pooled = h2[:, :, :n_pool * POOL].reshape(B, C, n_pool, POOL).max(axis=-1)
    return pooled.reshape(B, -1)


if __name__ == "__main__":
    key = jax.random.PRNGKey(0)
    kx, k1, k2, k3, k4 = jax.random.split(key, 5)

    # Smallest length that survives MaxPool1d(512): L - 2 - 31 = 512 -> L = 545.
    B, L = 2, 545
    x = jax.random.normal(kx, (B, 1, L), dtype=jnp.float32)

    # Deterministic PyTorch-style uniform(-1/sqrt(fan_in), 1/sqrt(fan_in)) init.
    bound1 = 1.0 / (1 * K1) ** 0.5
    w1 = jax.random.uniform(k1, (C1, 1, K1), jnp.float32, -bound1, bound1)
    b1 = jax.random.uniform(k2, (C1,), jnp.float32, -bound1, bound1)
    bound2 = 1.0 / (C1 * K2) ** 0.5
    w2 = jax.random.uniform(k3, (C2, C1, K2), jnp.float32, -bound2, bound2)
    b2 = jax.random.uniform(k4, (C2,), jnp.float32, -bound2, bound2)

    out = jax.block_until_ready(oned_cnn_pre(x, w1, b1, w2, b2))

    ref = _ref_forward(x, w1, b1, w2, b2)
    expected_F = C2 * (((L - K1 + 1) - K2 + 1) // POOL)
    assert out.shape == (B, expected_F), out.shape
    assert jnp.allclose(out, ref, atol=1e-4, rtol=1e-4), "mismatch vs reference"
    print("KERNEL_OK")
</pallas_src>

<mosaic_0001>
module attributes {stable_mosaic.version = 11 : i64} {
  func.func @_onedcnn_kernel(%arg0: i32, %arg1: memref<8x1x545xf32, #tpu.memory_space<vmem>>, %arg2: memref<20x34xf32, #tpu.memory_space<vmem>>, %arg3: memref<20x1xf32, #tpu.memory_space<vmem>>, %arg4: memref<8x20x1xf32, #tpu.memory_space<vmem>>) attributes {dimension_semantics = [#tpu.dimension_semantics<parallel>], iteration_bounds = array<i64: 1>, scalar_prefetch = 0 : i64, scratch_operands = 0 : i64, tpu.core_type = #tpu.core_type<tc>, window_params = [{transform_indices = @transform_0, window_bounds = array<i64: 8, 1, 545>}, {pipeline_mode = #tpu.pipeline_mode<synchronous>, transform_indices = @transform_1, window_bounds = array<i64: 20, 34>}, {pipeline_mode = #tpu.pipeline_mode<synchronous>, transform_indices = @transform_2, window_bounds = array<i64: 20, 1>}, {transform_indices = @transform_3, window_bounds = array<i64: 8, 20, 1>}]} {
    %c0 = arith.constant 0 : index
    %c0_0 = arith.constant 0 : index
    %0 = vector.load %arg2[%c0, %c0_0] : memref<20x34xf32, #tpu.memory_space<vmem>>, vector<20x34xf32>
    %c0_1 = arith.constant 0 : index
    %c0_2 = arith.constant 0 : index
    %1 = vector.load %arg3[%c0_1, %c0_2] : memref<20x1xf32, #tpu.memory_space<vmem>>, vector<20x1xf32>
    %c0_i32 = arith.constant 0 : i32
    %c8_i32 = arith.constant 8 : i32
    %2 = arith.addi %c0_i32, %c8_i32 : i32
    %c1_i32 = arith.constant 1 : i32
    scf.for %arg5 = %c0_i32 to %2 step %c1_i32  : i32 {
      %3 = arith.index_cast %arg5 : i32 to index
      %c0_4 = arith.constant 0 : index
      %c0_5 = arith.constant 0 : index
      %4 = vector.load %arg1[%3, %c0_4, %c0_5] : memref<8x1x545xf32, #tpu.memory_space<vmem>>, vector<1x1x545xf32>
      %5 = vector.shape_cast %4 : vector<1x1x545xf32> to vector<1x545xf32>
      %cst = arith.constant 0.000000e+00 : f32
      %6 = vector.broadcast %cst : f32 to vector<20x512xf32>
      %7 = vector.extract_strided_slice %0 {offsets = [0, 0], sizes = [20, 1], strides = [1, 1]} : vector<20x34xf32> to vector<20x1xf32>
      %8 = vector.extract_strided_slice %5 {offsets = [0, 0], sizes = [1, 512], strides = [1, 1]} : vector<1x545xf32> to vector<1x512xf32>
      %9 = vector.broadcast %7 : vector<20x1xf32> to vector<20x512xf32>
      %10 = vector.broadcast %8 : vector<1x512xf32> to vector<20x512xf32>
      %11 = arith.mulf %9, %10 : vector<20x512xf32>
      %12 = arith.addf %6, %11 : vector<20x512xf32>
      %13 = vector.extract_strided_slice %0 {offsets = [0, 1], sizes = [20, 1], strides = [1, 1]} : vector<20x34xf32> to vector<20x1xf32>
      %14 = vector.extract_strided_slice %5 {offsets = [0, 1], sizes = [1, 512], strides = [1, 1]} : vector<1x545xf32> to vector<1x512xf32>
      %15 = vector.broadcast %13 : vector<20x1xf32> to vector<20x512xf32>
      %16 = vector.broadcast %14 : vector<1x512xf32> to vector<20x512xf32>
      %17 = arith.mulf %15, %16 : vector<20x512xf32>
      %18 = arith.addf %12, %17 : vector<20x512xf32>
      %19 = vector.extract_strided_slice %0 {offsets = [0, 2], sizes = [20, 1], strides = [1, 1]} : vector<20x34xf32> to vector<20x1xf32>
      %20 = vector.extract_strided_slice %5 {offsets = [0, 2], sizes = [1, 512], strides = [1, 1]} : vector<1x545xf32> to vector<1x512xf32>
      %21 = vector.broadcast %19 : vector<20x1xf32> to vector<20x512xf32>
      %22 = vector.broadcast %20 : vector<1x512xf32> to vector<20x512xf32>
      %23 = arith.mulf %21, %22 : vector<20x512xf32>
      %24 = arith.addf %18, %23 : vector<20x512xf32>
      %25 = vector.extract_strided_slice %0 {offsets = [0, 3], sizes = [20, 1], strides = [1, 1]} : vector<20x34xf32> to vector<20x1xf32>
      %26 = vector.extract_strided_slice %5 {offsets = [0, 3], sizes = [1, 512], strides = [1, 1]} : vector<1x545xf32> to vector<1x512xf32>
      %27 = vector.broadcast %25 : vector<20x1xf32> to vector<20x512xf32>
      %28 = vector.broadcast %26 : vector<1x512xf32> to vector<20x512xf32>
      %29 = arith.mulf %27, %28 : vector<20x512xf32>
      %30 = arith.addf %24, %29 : vector<20x512xf32>
      %31 = vector.extract_strided_slice %0 {offsets = [0, 4], sizes = [20, 1], strides = [1, 1]} : vector<20x34xf32> to vector<20x1xf32>
      %32 = vector.extract_strided_slice %5 {offsets = [0, 4], sizes = [1, 512], strides = [1, 1]} : vector<1x545xf32> to vector<1x512xf32>
      %33 = vector.broadcast %31 : vector<20x1xf32> to vector<20x512xf32>
      %34 = vector.broadcast %32 : vector<1x512xf32> to vector<20x512xf32>
      %35 = arith.mulf %33, %34 : vector<20x512xf32>
      %36 = arith.addf %30, %35 : vector<20x512xf32>
      %37 = vector.extract_strided_slice %0 {offsets = [0, 5], sizes = [20, 1], strides = [1, 1]} : vector<20x34xf32> to vector<20x1xf32>
      %38 = vector.extract_strided_slice %5 {offsets = [0, 5], sizes = [1, 512], strides = [1, 1]} : vector<1x545xf32> to vector<1x512xf32>
      %39 = vector.broadcast %37 : vector<20x1xf32> to vector<20x512xf32>
      %40 = vector.broadcast %38 : vector<1x512xf32> to vector<20x512xf32>
      %41 = arith.mulf %39, %40 : vector<20x512xf32>
      %42 = arith.addf %36, %41 : vector<20x512xf32>
      %43 = vector.extract_strided_slice %0 {offsets = [0, 6], sizes = [20, 1], strides = [1, 1]} : vector<20x34xf32> to vector<20x1xf32>
      %44 = vector.extract_strided_slice %5 {offsets = [0, 6], sizes = [1, 512], strides = [1, 1]} : vector<1x545xf32> to vector<1x512xf32>
      %45 = vector.broadcast %43 : vector<20x1xf32> to vector<20x512xf32>
      %46 = vector.broadcast %44 : vector<1x512xf32> to vector<20x512xf32>
      %47 = arith.mulf %45, %46 : vector<20x512xf32>
      %48 = arith.addf %42, %47 : vector<20x512xf32>
      %49 = vector.extract_strided_slice %0 {offsets = [0, 7], sizes = [20, 1], strides = [1, 1]} : vector<20x34xf32> to vector<20x1xf32>
      %50 = vector.extract_strided_slice %5 {offsets = [0, 7], sizes = [1, 512], strides = [1, 1]} : vector<1x545xf32> to vector<1x512xf32>
      %51 = vector.broadcast %49 : vector<20x1xf32> to vector<20x512xf32>
      %52 = vector.broadcast %50 : vector<1x512xf32> to vector<20x512xf32>
      %53 = arith.mulf %51, %52 : vector<20x512xf32>
      %54 = arith.addf %48, %53 : vector<20x512xf32>
      %55 = vector.extract_strided_slice %0 {offsets = [0, 8], sizes = [20, 1], strides = [1, 1]} : vector<20x34xf32> to vector<20x1xf32>
      %56 = vector.extract_strided_slice %5 {offsets = [0, 8], sizes = [1, 512], strides = [1, 1]} : vector<1x545xf32> to vector<1x512xf32>
      %57 = vector.broadcast %55 : vector<20x1xf32> to vector<20x512xf32>
      %58 = vector.broadcast %56 : vector<1x512xf32> to vector<20x512xf32>
      %59 = arith.mulf %57, %58 : vector<20x512xf32>
      %60 = arith.addf %54, %59 : vector<20x512xf32>
      %61 = vector.extract_strided_slice %0 {offsets = [0, 9], sizes = [20, 1], strides = [1, 1]} : vector<20x34xf32> to vector<20x1xf32>
      %62 = vector.extract_strided_slice %5 {offsets = [0, 9], sizes = [1, 512], strides = [1, 1]} : vector<1x545xf32> to vector<1x512xf32>
      %63 = vector.broadcast %61 : vector<20x1xf32> to vector<20x512xf32>
      %64 = vector.broadcast %62 : vector<1x512xf32> to vector<20x512xf32>
      %65 = arith.mulf %63, %64 : vector<20x512xf32>
      %66 = arith.addf %60, %65 : vector<20x512xf32>
      %67 = vector.extract_strided_slice %0 {offsets = [0, 10], sizes = [20, 1], strides = [1, 1]} : vector<20x34xf32> to vector<20x1xf32>
      %68 = vector.extract_strided_slice %5 {offsets = [0, 10], sizes = [1, 512], strides = [1, 1]} : vector<1x545xf32> to vector<1x512xf32>
      %69 = vector.broadcast %67 : vector<20x1xf32> to vector<20x512xf32>
      %70 = vector.broadcast %68 : vector<1x512xf32> to vector<20x512xf32>
      %71 = arith.mulf %69, %70 : vector<20x512xf32>
      %72 = arith.addf %66, %71 : vector<20x512xf32>
      %73 = vector.extract_strided_slice %0 {offsets = [0, 11], sizes = [20, 1], strides = [1, 1]} : vector<20x34xf32> to vector<20x1xf32>
      %74 = vector.extract_strided_slice %5 {offsets = [0, 11], sizes = [1, 512], strides = [1, 1]} : vector<1x545xf32> to vector<1x512xf32>
      %75 = vector.broadcast %73 : vector<20x1xf32> to vector<20x512xf32>
      %76 = vector.broadcast %74 : vector<1x512xf32> to vector<20x512xf32>
      %77 = arith.mulf %75, %76 : vector<20x512xf32>
      %78 = arith.addf %72, %77 : vector<20x512xf32>
      %79 = vector.extract_strided_slice %0 {offsets = [0, 12], sizes = [20, 1], strides = [1, 1]} : vector<20x34xf32> to vector<20x1xf32>
      %80 = vector.extract_strided_slice %5 {offsets = [0, 12], sizes = [1, 512], strides = [1, 1]} : vector<1x545xf32> to vector<1x512xf32>
      %81 = vector.broadcast %79 : vector<20x1xf32> to vector<20x512xf32>
      %82 = vector.broadcast %80 : vector<1x512xf32> to vector<20x512xf32>
      %83 = arith.mulf %81, %82 : vector<20x512xf32>
      %84 = arith.addf %78, %83 : vector<20x512xf32>
      %85 = vector.extract_strided_slice %0 {offsets = [0, 13], sizes = [20, 1], strides = [1, 1]} : vector<20x34xf32> to vector<20x1xf32>
      %86 = vector.extract_strided_slice %5 {offsets = [0, 13], sizes = [1, 512], strides = [1, 1]} : vector<1x545xf32> to vector<1x512xf32>
      %87 = vector.broadcast %85 : vector<20x1xf32> to vector<20x512xf32>
      %88 = vector.broadcast %86 : vector<1x512xf32> to vector<20x512xf32>
      %89 = arith.mulf %87, %88 : vector<20x512xf32>
      %90 = arith.addf %84, %89 : vector<20x512xf32>
      %91 = vector.extract_strided_slice %0 {offsets = [0, 14], sizes = [20, 1], strides = [1, 1]} : vector<20x34xf32> to vector<20x1xf32>
      %92 = vector.extract_strided_slice %5 {offsets = [0, 14], sizes = [1, 512], strides = [1, 1]} : vector<1x545xf32> to vector<1x512xf32>
      %93 = vector.broadcast %91 : vector<20x1xf32> to vector<20x512xf32>
      %94 = vector.broadcast %92 : vector<1x512xf32> to vector<20x512xf32>
      %95 = arith.mulf %93, %94 : vector<20x512xf32>
      %96 = arith.addf %90, %95 : vector<20x512xf32>
      %97 = vector.extract_strided_slice %0 {offsets = [0, 15], sizes = [20, 1], strides = [1, 1]} : vector<20x34xf32> to vector<20x1xf32>
      %98 = vector.extract_strided_slice %5 {offsets = [0, 15], sizes = [1, 512], strides = [1, 1]} : vector<1x545xf32> to vector<1x512xf32>
      %99 = vector.broadcast %97 : vector<20x1xf32> to vector<20x512xf32>
      %100 = vector.broadcast %98 : vector<1x512xf32> to vector<20x512xf32>
      %101 = arith.mulf %99, %100 : vector<20x512xf32>
      %102 = arith.addf %96, %101 : vector<20x512xf32>
      %103 = vector.extract_strided_slice %0 {offsets = [0, 16], sizes = [20, 1], strides = [1, 1]} : vector<20x34xf32> to vector<20x1xf32>
      %104 = vector.extract_strided_slice %5 {offsets = [0, 16], sizes = [1, 512], strides = [1, 1]} : vector<1x545xf32> to vector<1x512xf32>
      %105 = vector.broadcast %103 : vector<20x1xf32> to vector<20x512xf32>
      %106 = vector.broadcast %104 : vector<1x512xf32> to vector<20x512xf32>
      %107 = arith.mulf %105, %106 : vector<20x512xf32>
      %108 = arith.addf %102, %107 : vector<20x512xf32>
      %109 = vector.extract_strided_slice %0 {offsets = [0, 17], sizes = [20, 1], strides = [1, 1]} : vector<20x34xf32> to vector<20x1xf32>
      %110 = vector.extract_strided_slice %5 {offsets = [0, 17], sizes = [1, 512], strides = [1, 1]} : vector<1x545xf32> to vector<1x512xf32>
      %111 = vector.broadcast %109 : vector<20x1xf32> to vector<20x512xf32>
      %112 = vector.broadcast %110 : vector<1x512xf32> to vector<20x512xf32>
      %113 = arith.mulf %111, %112 : vector<20x512xf32>
      %114 = arith.addf %108, %113 : vector<20x512xf32>
      %115 = vector.extract_strided_slice %0 {offsets = [0, 18], sizes = [20, 1], strides = [1, 1]} : vector<20x34xf32> to vector<20x1xf32>
      %116 = vector.extract_strided_slice %5 {offsets = [0, 18], sizes = [1, 512], strides = [1, 1]} : vector<1x545xf32> to vector<1x512xf32>
      %117 = vector.broadcast %115 : vector<20x1xf32> to vector<20x512xf32>
      %118 = vector.broadcast %116 : vector<1x512xf32> to vector<20x512xf32>
      %119 = arith.mulf %117, %118 : vector<20x512xf32>
      %120 = arith.addf %114, %119 : vector<20x512xf32>
      %121 = vector.extract_strided_slice %0 {offsets = [0, 19], sizes = [20, 1], strides = [1, 1]} : vector<20x34xf32> to vector<20x1xf32>
      %122 = vector.extract_strided_slice %5 {offsets = [0, 19], sizes = [1, 512], strides = [1, 1]} : vector<1x545xf32> to vector<1x512xf32>
      %123 = vector.broadcast %121 : vector<20x1xf32> to vector<20x512xf32>
      %124 = vector.broadcast %122 : vector<1x512xf32> to vector<20x512xf32>
      %125 = arith.mulf %123, %124 : vector<20x512xf32>
      %126 = arith.addf %120, %125 : vector<20x512xf32>
      %127 = vector.extract_strided_slice %0 {offsets = [0, 20], sizes = [20, 1], strides = [1, 1]} : vector<20x34xf32> to vector<20x1xf32>
      %128 = vector.extract_strided_slice %5 {offsets = [0, 20], sizes = [1, 512], strides = [1, 1]} : vector<1x545xf32> to vector<1x512xf32>
      %129 = vector.broadcast %127 : vector<20x1xf32> to vector<20x512xf32>
      %130 = vector.broadcast %128 : vector<1x512xf32> to vector<20x512xf32>
      %131 = arith.mulf %129, %130 : vector<20x512xf32>
      %132 = arith.addf %126, %131 : vector<20x512xf32>
      %133 = vector.extract_strided_slice %0 {offsets = [0, 21], sizes = [20, 1], strides = [1, 1]} : vector<20x34xf32> to vector<20x1xf32>
      %134 = vector.extract_strided_slice %5 {offsets = [0, 21], sizes = [1, 512], strides = [1, 1]} : vector<1x545xf32> to vector<1x512xf32>
      %135 = vector.broadcast %133 : vector<20x1xf32> to vector<20x512xf32>
      %136 = vector.broadcast %134 : vector<1x512xf32> to vector<20x512xf32>
      %137 = arith.mulf %135, %136 : vector<20x512xf32>
      %138 = arith.addf %132, %137 : vector<20x512xf32>
      %139 = vector.extract_strided_slice %0 {offsets = [0, 22], sizes = [20, 1], strides = [1, 1]} : vector<20x34xf32> to vector<20x1xf32>
      %140 = vector.extract_strided_slice %5 {offsets = [0, 22], sizes = [1, 512], strides = [1, 1]} : vector<1x545xf32> to vector<1x512xf32>
      %141 = vector.broadcast %139 : vector<20x1xf32> to vector<20x512xf32>
      %142 = vector.broadcast %140 : vector<1x512xf32> to vector<20x512xf32>
      %143 = arith.mulf %141, %142 : vector<20x512xf32>
      %144 = arith.addf %138, %143 : vector<20x512xf32>
      %145 = vector.extract_strided_slice %0 {offsets = [0, 23], sizes = [20, 1], strides = [1, 1]} : vector<20x34xf32> to vector<20x1xf32>
      %146 = vector.extract_strided_slice %5 {offsets = [0, 23], sizes = [1, 512], strides = [1, 1]} : vector<1x545xf32> to vector<1x512xf32>
      %147 = vector.broadcast %145 : vector<20x1xf32> to vector<20x512xf32>
      %148 = vector.broadcast %146 : vector<1x512xf32> to vector<20x512xf32>
      %149 = arith.mulf %147, %148 : vector<20x512xf32>
      %150 = arith.addf %144, %149 : vector<20x512xf32>
      %151 = vector.extract_strided_slice %0 {offsets = [0, 24], sizes = [20, 1], strides = [1, 1]} : vector<20x34xf32> to vector<20x1xf32>
      %152 = vector.extract_strided_slice %5 {offsets = [0, 24], sizes = [1, 512], strides = [1, 1]} : vector<1x545xf32> to vector<1x512xf32>
      %153 = vector.broadcast %151 : vector<20x1xf32> to vector<20x512xf32>
      %154 = vector.broadcast %152 : vector<1x512xf32> to vector<20x512xf32>
      %155 = arith.mulf %153, %154 : vector<20x512xf32>
      %156 = arith.addf %150, %155 : vector<20x512xf32>
      %157 = vector.extract_strided_slice %0 {offsets = [0, 25], sizes = [20, 1], strides = [1, 1]} : vector<20x34xf32> to vector<20x1xf32>
      %158 = vector.extract_strided_slice %5 {offsets = [0, 25], sizes = [1, 512], strides = [1, 1]} : vector<1x545xf32> to vector<1x512xf32>
      %159 = vector.broadcast %157 : vector<20x1xf32> to vector<20x512xf32>
      %160 = vector.broadcast %158 : vector<1x512xf32> to vector<20x512xf32>
      %161 = arith.mulf %159, %160 : vector<20x512xf32>
      %162 = arith.addf %156, %161 : vector<20x512xf32>
      %163 = vector.extract_strided_slice %0 {offsets = [0, 26], sizes = [20, 1], strides = [1, 1]} : vector<20x34xf32> to vector<20x1xf32>
      %164 = vector.extract_strided_slice %5 {offsets = [0, 26], sizes = [1, 512], strides = [1, 1]} : vector<1x545xf32> to vector<1x512xf32>
      %165 = vector.broadcast %163 : vector<20x1xf32> to vector<20x512xf32>
      %166 = vector.broadcast %164 : vector<1x512xf32> to vector<20x512xf32>
      %167 = arith.mulf %165, %166 : vector<20x512xf32>
      %168 = arith.addf %162, %167 : vector<20x512xf32>
      %169 = vector.extract_strided_slice %0 {offsets = [0, 27], sizes = [20, 1], strides = [1, 1]} : vector<20x34xf32> to vector<20x1xf32>
      %170 = vector.extract_strided_slice %5 {offsets = [0, 27], sizes = [1, 512], strides = [1, 1]} : vector<1x545xf32> to vector<1x512xf32>
      %171 = vector.broadcast %169 : vector<20x1xf32> to vector<20x512xf32>
      %172 = vector.broadcast %170 : vector<1x512xf32> to vector<20x512xf32>
      %173 = arith.mulf %171, %172 : vector<20x512xf32>
      %174 = arith.addf %168, %173 : vector<20x512xf32>
      %175 = vector.extract_strided_slice %0 {offsets = [0, 28], sizes = [20, 1], strides = [1, 1]} : vector<20x34xf32> to vector<20x1xf32>
      %176 = vector.extract_strided_slice %5 {offsets = [0, 28], sizes = [1, 512], strides = [1, 1]} : vector<1x545xf32> to vector<1x512xf32>
      %177 = vector.broadcast %175 : vector<20x1xf32> to vector<20x512xf32>
      %178 = vector.broadcast %176 : vector<1x512xf32> to vector<20x512xf32>
      %179 = arith.mulf %177, %178 : vector<20x512xf32>
      %180 = arith.addf %174, %179 : vector<20x512xf32>
      %181 = vector.extract_strided_slice %0 {offsets = [0, 29], sizes = [20, 1], strides = [1, 1]} : vector<20x34xf32> to vector<20x1xf32>
      %182 = vector.extract_strided_slice %5 {offsets = [0, 29], sizes = [1, 512], strides = [1, 1]} : vector<1x545xf32> to vector<1x512xf32>
      %183 = vector.broadcast %181 : vector<20x1xf32> to vector<20x512xf32>
      %184 = vector.broadcast %182 : vector<1x512xf32> to vector<20x512xf32>
      %185 = arith.mulf %183, %184 : vector<20x512xf32>
      %186 = arith.addf %180, %185 : vector<20x512xf32>
      %187 = vector.extract_strided_slice %0 {offsets = [0, 30], sizes = [20, 1], strides = [1, 1]} : vector<20x34xf32> to vector<20x1xf32>
      %188 = vector.extract_strided_slice %5 {offsets = [0, 30], sizes = [1, 512], strides = [1, 1]} : vector<1x545xf32> to vector<1x512xf32>
      %189 = vector.broadcast %187 : vector<20x1xf32> to vector<20x512xf32>
      %190 = vector.broadcast %188 : vector<1x512xf32> to vector<20x512xf32>
      %191 = arith.mulf %189, %190 : vector<20x512xf32>
      %192 = arith.addf %186, %191 : vector<20x512xf32>
      %193 = vector.extract_strided_slice %0 {offsets = [0, 31], sizes = [20, 1], strides = [1, 1]} : vector<20x34xf32> to vector<20x1xf32>
      %194 = vector.extract_strided_slice %5 {offsets = [0, 31], sizes = [1, 512], strides = [1, 1]} : vector<1x545xf32> to vector<1x512xf32>
      %195 = vector.broadcast %193 : vector<20x1xf32> to vector<20x512xf32>
      %196 = vector.broadcast %194 : vector<1x512xf32> to vector<20x512xf32>
      %197 = arith.mulf %195, %196 : vector<20x512xf32>
      %198 = arith.addf %192, %197 : vector<20x512xf32>
      %199 = vector.extract_strided_slice %0 {offsets = [0, 32], sizes = [20, 1], strides = [1, 1]} : vector<20x34xf32> to vector<20x1xf32>
      %200 = vector.extract_strided_slice %5 {offsets = [0, 32], sizes = [1, 512], strides = [1, 1]} : vector<1x545xf32> to vector<1x512xf32>
      %201 = vector.broadcast %199 : vector<20x1xf32> to vector<20x512xf32>
      %202 = vector.broadcast %200 : vector<1x512xf32> to vector<20x512xf32>
      %203 = arith.mulf %201, %202 : vector<20x512xf32>
      %204 = arith.addf %198, %203 : vector<20x512xf32>
      %205 = vector.extract_strided_slice %0 {offsets = [0, 33], sizes = [20, 1], strides = [1, 1]} : vector<20x34xf32> to vector<20x1xf32>
      %206 = vector.extract_strided_slice %5 {offsets = [0, 33], sizes = [1, 512], strides = [1, 1]} : vector<1x545xf32> to vector<1x512xf32>
      %207 = vector.broadcast %205 : vector<20x1xf32> to vector<20x512xf32>
      %208 = vector.broadcast %206 : vector<1x512xf32> to vector<20x512xf32>
      %209 = arith.mulf %207, %208 : vector<20x512xf32>
      %210 = arith.addf %204, %209 : vector<20x512xf32>
      %211 = vector.extract_strided_slice %210 {offsets = [0, 0], sizes = [20, 128], strides = [1, 1]} : vector<20x512xf32> to vector<20x128xf32>
      %212 = vector.extract_strided_slice %210 {offsets = [0, 128], sizes = [20, 128], strides = [1, 1]} : vector<20x512xf32> to vector<20x128xf32>
      %213 = arith.maximumf %211, %212 : vector<20x128xf32>
      %214 = vector.extract_strided_slice %210 {offsets = [0, 256], sizes = [20, 128], strides = [1, 1]} : vector<20x512xf32> to vector<20x128xf32>
      %215 = arith.maximumf %213, %214 : vector<20x128xf32>
      %216 = vector.extract_strided_slice %210 {offsets = [0, 384], sizes = [20, 128], strides = [1, 1]} : vector<20x512xf32> to vector<20x128xf32>
      %217 = arith.maximumf %215, %216 : vector<20x128xf32>
      %cst_6 = arith.constant dense<0xFF800000> : vector<20xf32>
      %218 = vector.multi_reduction <maximumf>, %217, %cst_6 [1] : vector<20x128xf32> to vector<20xf32>
      %219 = vector.shape_cast %218 : vector<20xf32> to vector<20x1xf32>
      %220 = arith.addf %219, %1 : vector<20x1xf32>
      %221 = arith.index_cast %arg5 : i32 to index
      %c0_7 = arith.constant 0 : index
      %c0_8 = arith.constant 0 : index
      %222 = vector.load %arg4[%221, %c0_7, %c0_8] : memref<8x20x1xf32, #tpu.memory_space<vmem>>, vector<1x20x1xf32>
      %223 = vector.shape_cast %222 : vector<1x20x1xf32> to vector<20x1xf32>
      %224 = vector.shape_cast %220 : vector<20x1xf32> to vector<1x20x1xf32>
      tpu.vector_store %arg4[%221, %c0_7, %c0_8], %224 {strides = array<i32>} : memref<8x20x1xf32, #tpu.memory_space<vmem>>, vector<1x20x1xf32>,
    }
    %c8_i32_3 = arith.constant 8 : i32
    return
  }
  func.func @transform_0(%arg0: i32) -> (i32, i32, i32) {
    %c0_i32 = arith.constant 0 : i32
    %c0_i32_0 = arith.constant 0 : i32
    %c0_i32_1 = arith.constant 0 : i32
    return %arg0, %c0_i32, %c0_i32_0 : i32, i32, i32
  }
  func.func @transform_1(%arg0: i32) -> (i32, i32) {
    %c0_i32 = arith.constant 0 : i32
    %c0_i32_0 = arith.constant 0 : i32
    %c0_i32_1 = arith.constant 0 : i32
    return %c0_i32, %c0_i32_0 : i32, i32
  }
  func.func @transform_2(%arg0: i32) -> (i32, i32) {
    %c0_i32 = arith.constant 0 : i32
    %c0_i32_0 = arith.constant 0 : i32
    %c0_i32_1 = arith.constant 0 : i32
    return %c0_i32, %c0_i32_0 : i32, i32
  }
  func.func @transform_3(%arg0: i32) -> (i32, i32, i32) {
    %c0_i32 = arith.constant 0 : i32
    %c0_i32_0 = arith.constant 0 : i32
    %c0_i32_1 = arith.constant 0 : i32
    return %arg0, %c0_i32, %c0_i32_0 : i32, i32, i32
  }
}

</mosaic_0001>

<llo_original>
// kernel: tpu_custom_call.1
$region0: #{tpu_custom_call.1}
  #allocation0 [shape = 'u32[]', space=smem, size = 0x4, offset = 0x4, fixed_abs, tag = 'smem constant byte address 0x4 - core index']
  #allocation1 [shape = 'u32[144,128]{1,0:T(1,128)}', space=vmem, size = 0x12000, scoped, tag = 'internal scratch']
  %s0 = inlined_call_operand.hbm [shape: f32[8,1,545], index: 0, kind: input, shape index: {}]
  %s1 = inlined_call_operand.vmem [shape: f32[20,34], index: 1, kind: input, shape index: {}]
  %s2 = inlined_call_operand.vmem [shape: f32[20,1], index: 2, kind: input, shape index: {}]
  %s3 = inlined_call_operand.vmem [shape: f32[8,20,1], index: 3, kind: output, shape index: {}]
  %s4 = sld [smem:[#allocation0]]
  $region33: #{tpu_custom_call.1} parent=0
    _
  %s6 = ssub.s32 1, %s4
  %s7 = scalar_select 0, %s6, %s4
  $region1: #{tpu_custom_call.1} parent=0
    #allocation2 [shape = 'u8[20480]{0}', space=vmem, size = 0x5000, scoped, tag = 'input window, operand 0, single buffered']
    #allocation3 [shape = 's32[1]{0}', space=sflag, size = 0x4, scoped, tag = 'scoped memory for tpu_custom_call.1']
    %8 = vsyncpa [#allocation3], 0
    // Predicated region
    $region2: #{tpu_custom_call.1} parent=1 // pred_check
      _
    $region3: #{tpu_custom_call.1} parent=1 // pred_check_branch
      %10 = sbr.rel (0) target = $region5
    $region4: #{tpu_custom_call.1} parent=1 // pred_region
      %s12 = ssub.s32 640, 640
      %13 = vsyncadd [#allocation3], %s12
      %s14 = sshll.u32 [#allocation2], 4
      %s15 = int_to_ptr.vmem [resolvable:$true] %s14
      %20 = dma.hbm_to_vmem [thread:$0]  %s0, 640, %s15, [#allocation3], 80, 80, 5
    $region5: #{tpu_custom_call.1} parent=1 // pred_fallthru
      _
    // Predicated region
    $region6: #{tpu_custom_call.1} parent=1 // pred_check
      _
    $region7: #{tpu_custom_call.1} parent=1 // pred_check_branch
      %22 = sbr.rel (0) target = $region9
    $region8: #{tpu_custom_call.1} parent=1 // pred_region
      _
    $region9: #{tpu_custom_call.1} parent=1 // pred_fallthru
      _
    // Predicated region
    $region10: #{tpu_custom_call.1} parent=1 // pred_check
      _
    $region11: #{tpu_custom_call.1} parent=1 // pred_check_branch
      %24 = sbr.rel (0) target = $region13
    $region12: #{tpu_custom_call.1} parent=1 // pred_region
      _
    $region13: #{tpu_custom_call.1} parent=1 // pred_fallthru
      _
    // Predicated region
    $region14: #{tpu_custom_call.1} parent=1 // pred_check
      _
    $region15: #{tpu_custom_call.1} parent=1 // pred_check_branch
      %26 = sbr.rel (0) target = $region17
    $region16: #{tpu_custom_call.1} parent=1 // pred_region
      %27 = dma.done [#allocation3], 640
    $region17: #{tpu_custom_call.1} parent=1 // pred_fallthru
      _
    %v28 = vld [vmem:[%s1] sm:$0xff]
    %v29 = vld [vmem:[%s1 + $0x8] sm:$0xff]
    %v30 = vld [vmem:[%s1 + $0x10] sm:$0xf]
    %v31 = vld [vmem:[%s2] sm:$0xff]
    %v32 = vld [vmem:[%s2 + $0x8] sm:$0xff]
    %v33 = vld [vmem:[%s2 + $0x10] sm:$0xf]
    loop: start=0, step=1, limit=8
    $region18: #{tpu_custom_call.1} parent=1 // loop_pre_header
      _
    $region19: #{tpu_custom_call.1} parent=1 // loop_header
      %s35 = sphi 0, %s39
      %p36 = scmp.ge.s32.totalorder %s35, 8
    $region20: #{tpu_custom_call.1} parent=1 // loop_header_branch
      %38 = sbr.rel (%p36) target = $region24
    $region21: #{tpu_custom_call.1} parent=1 // loop_body
      %s40 = smul.u32 %s35, 5
      %s41 = scalar_lea.vmem [#allocation2], %s40
      %v42 = vld [vmem:[%s41] sm:$0x1f]
      %44 = vset.pattern.permute.xlu0 0
      %45 = vperm.xlu0 %44, %v28
      %v46 = vpop.permute.xlu0 %45
      %49 = vset.pattern.permute.xlu0 0
      %50 = vperm.xlu0 %49, %v29
      %v51 = vpop.permute.xlu0 %50
      %54 = vset.pattern.permute.xlu0 0
      %55 = vperm.xlu0 %54, %v30
      %v56 = vpop.permute.xlu0 %55
      %v59 = vlaneseq
      %v60 = vshrl.u32 %v59, 7
      %v61 = vsub.s32 0, %v60
      %v62 = vrot.slane %v42, %v61
      %v63 = vlaneseq
      %v64 = vshrl.u32 %v63, 7
      %v65 = vsub.s32 1, %v64
      %v66 = vrot.slane %v42, %v65
      %v67 = vlaneseq
      %v68 = vshrl.u32 %v67, 7
      %v69 = vsub.s32 2, %v68
      %v70 = vrot.slane %v42, %v69
      %v71 = vlaneseq
      %v72 = vshrl.u32 %v71, 7
      %v73 = vsub.s32 3, %v72
      %v74 = vrot.slane %v42, %v73
      %v79 = vmul.f32 %v46, %v62
      %v80 = vmul.f32 %v46, %v66
      %v81 = vmul.f32 %v46, %v70
      %v82 = vmul.f32 %v46, %v74
      %v83 = vmul.f32 %v51, %v62
      %v84 = vmul.f32 %v51, %v66
      %v85 = vmul.f32 %v51, %v70
      %v86 = vmul.f32 %v51, %v74
      %v87 = vmul.f32 %v56, %v62
      %v88 = vmul.f32 %v56, %v66
      %v89 = vmul.f32 %v56, %v70
      %v90 = vmul.f32 %v56, %v74
      %v91 = vadd.f32 %v79, 0.0
      %v92 = vadd.f32 %v80, 0.0
      %v93 = vadd.f32 %v81, 0.0
      %v94 = vadd.f32 %v82, 0.0
      %v95 = vadd.f32 %v83, 0.0
      %v96 = vadd.f32 %v84, 0.0
      %v97 = vadd.f32 %v85, 0.0
      %v98 = vadd.f32 %v86, 0.0
      %v99 = vadd.f32 %v87, 0.0
      %v100 = vadd.f32 %v88, 0.0
      %v101 = vadd.f32 %v89, 0.0
      %v102 = vadd.f32 %v90, 0.0
      %103 = vset.pattern.permute.xlu0 1
      %104 = vperm.xlu0 %103, %v28
      %v105 = vpop.permute.xlu0 %104
      %107 = vset.pattern.permute.xlu0 1
      %108 = vperm.xlu0 %107, %v29
      %v109 = vpop.permute.xlu0 %108
      %111 = vset.pattern.permute.xlu0 1
      %112 = vperm.xlu0 %111, %v30
      %v113 = vpop.permute.xlu0 %112
      %v115 = vlaneseq
      %v116 = vshrl.u32 %v115, 7
      %v117 = vsub.s32 4, %v116
      %v118 = vrot.slane %v42, %v117
      %v120 = vmul.f32 %v105, %v62
      %v121 = vmul.f32 %v105, %v66
      %v122 = vmul.f32 %v105, %v70
      %v123 = vmul.f32 %v105, %v74
      %v124 = vmul.f32 %v105, %v118
      %v125 = vmul.f32 %v109, %v62
      %v126 = vmul.f32 %v109, %v66
      %v127 = vmul.f32 %v109, %v70
      %v128 = vmul.f32 %v109, %v74
      %v129 = vmul.f32 %v109, %v118
      %v130 = vmul.f32 %v113, %v62
      %v131 = vmul.f32 %v113, %v66
      %v132 = vmul.f32 %v113, %v70
      %v133 = vmul.f32 %v113, %v74
      %v134 = vmul.f32 %v113, %v118
      %150 = vrot.lane.b32.xlu0 %v120, 127
      %v151 = vpop.permute.xlu0 %150
      %152 = vrot.lane.b32.xlu0 %v121, 127
      %v153 = vpop.permute.xlu0 %152
      %154 = vrot.lane.b32.xlu0 %v122, 127
      %v155 = vpop.permute.xlu0 %154
      %156 = vrot.lane.b32.xlu0 %v123, 127
      %v157 = vpop.permute.xlu0 %156
      %158 = vrot.lane.b32.xlu0 %v124, 127
      %v159 = vpop.permute.xlu0 %158
      %160 = vrot.lane.b32.xlu0 %v125, 127
      %v161 = vpop.permute.xlu0 %160
      %162 = vrot.lane.b32.xlu0 %v126, 127
      %v163 = vpop.permute.xlu0 %162
      %164 = vrot.lane.b32.xlu0 %v127, 127
      %v165 = vpop.permute.xlu0 %164
      %166 = vrot.lane.b32.xlu0 %v128, 127
      %v167 = vpop.permute.xlu0 %166
      %168 = vrot.lane.b32.xlu0 %v129, 127
      %v169 = vpop.permute.xlu0 %168
      %170 = vrot.lane.b32.xlu0 %v130, 127
      %v171 = vpop.permute.xlu0 %170
      %172 = vrot.lane.b32.xlu0 %v131, 127
      %v173 = vpop.permute.xlu0 %172
      %174 = vrot.lane.b32.xlu0 %v132, 127
      %v175 = vpop.permute.xlu0 %174
      %176 = vrot.lane.b32.xlu0 %v133, 127
      %v177 = vpop.permute.xlu0 %176
      %178 = vrot.lane.b32.xlu0 %v134, 127
      %v179 = vpop.permute.xlu0 %178
      %vm180 = vcmask 1039360
      %v181 = vsel %vm180, %v151, %v153
      %v182 = vsel %vm180, %v153, %v155
      %v183 = vsel %vm180, %v155, %v157
      %v184 = vsel %vm180, %v157, %v159
      %v185 = vsel %vm180, %v161, %v163
      %v186 = vsel %vm180, %v163, %v165
      %v187 = vsel %vm180, %v165, %v167
      %v188 = vsel %vm180, %v167, %v169
      %v189 = vsel %vm180, %v171, %v173
      %v190 = vsel %vm180, %v173, %v175
      %v191 = vsel %vm180, %v175, %v177
      %v192 = vsel %vm180, %v177, %v179
      %v205 = vadd.f32 %v91, %v181
      %v206 = vadd.f32 %v92, %v182
      %v207 = vadd.f32 %v93, %v183
      %v208 = vadd.f32 %v94, %v184
      %v209 = vadd.f32 %v95, %v185
      %v210 = vadd.f32 %v96, %v186
      %v211 = vadd.f32 %v97, %v187
      %v212 = vadd.f32 %v98, %v188
      %v213 = vadd.f32 %v99, %v189
      %v214 = vadd.f32 %v100, %v190
      %v215 = vadd.f32 %v101, %v191
      %v216 = vadd.f32 %v102, %v192
      %217 = vset.pattern.permute.xlu0 2
      %218 = vperm.xlu0 %217, %v28
      %v219 = vpop.permute.xlu0 %218
      %221 = vset.pattern.permute.xlu0 2
      %222 = vperm.xlu0 %221, %v29
      %v223 = vpop.permute.xlu0 %222
      %225 = vset.pattern.permute.xlu0 2
      %226 = vperm.xlu0 %225, %v30
      %v227 = vpop.permute.xlu0 %226
      %v229 = vmul.f32 %v219, %v62
      %v230 = vmul.f32 %v219, %v66
      %v231 = vmul.f32 %v219, %v70
      %v232 = vmul.f32 %v219, %v74
      %v233 = vmul.f32 %v219, %v118
      %v234 = vmul.f32 %v223, %v62
      %v235 = vmul.f32 %v223, %v66
      %v236 = vmul.f32 %v223, %v70
      %v237 = vmul.f32 %v223, %v74
      %v238 = vmul.f32 %v223, %v118
      %v239 = vmul.f32 %v227, %v62
      %v240 = vmul.f32 %v227, %v66
      %v241 = vmul.f32 %v227, %v70
      %v242 = vmul.f32 %v227, %v74
      %v243 = vmul.f32 %v227, %v118
      %259 = vrot.lane.b32.xlu0 %v229, 126
      %v260 = vpop.permute.xlu0 %259
      %261 = vrot.lane.b32.xlu0 %v230, 126
      %v262 = vpop.permute.xlu0 %261
      %263 = vrot.lane.b32.xlu0 %v231, 126
      %v264 = vpop.permute.xlu0 %263
      %265 = vrot.lane.b32.xlu0 %v232, 126
      %v266 = vpop.permute.xlu0 %265
      %267 = vrot.lane.b32.xlu0 %v233, 126
      %v268 = vpop.permute.xlu0 %267
      %269 = vrot.lane.b32.xlu0 %v234, 126
      %v270 = vpop.permute.xlu0 %269
      %271 = vrot.lane.b32.xlu0 %v235, 126
      %v272 = vpop.permute.xlu0 %271
      %273 = vrot.lane.b32.xlu0 %v236, 126
      %v274 = vpop.permute.xlu0 %273
      %275 = vrot.lane.b32.xlu0 %v237, 126
      %v276 = vpop.permute.xlu0 %275
      %277 = vrot.lane.b32.xlu0 %v238, 126
      %v278 = vpop.permute.xlu0 %277
      %279 = vrot.lane.b32.xlu0 %v239, 126
      %v280 = vpop.permute.xlu0 %279
      %281 = vrot.lane.b32.xlu0 %v240, 126
      %v282 = vpop.permute.xlu0 %281
      %283 = vrot.lane.b32.xlu0 %v241, 126
      %v284 = vpop.permute.xlu0 %283
      %285 = vrot.lane.b32.xlu0 %v242, 126
      %v286 = vpop.permute.xlu0 %285
      %287 = vrot.lane.b32.xlu0 %v243, 126
      %v288 = vpop.permute.xlu0 %287
      %vm289 = vcmask 1031168
      %v290 = vsel %vm289, %v260, %v262
      %v291 = vsel %vm289, %v262, %v264
      %v292 = vsel %vm289, %v264, %v266
      %v293 = vsel %vm289, %v266, %v268
      %v294 = vsel %vm289, %v270, %v272
      %v295 = vsel %vm289, %v272, %v274
      %v296 = vsel %vm289, %v274, %v276
      %v297 = vsel %vm289, %v276, %v278
      %v298 = vsel %vm289, %v280, %v282
      %v299 = vsel %vm289, %v282, %v284
      %v300 = vsel %vm289, %v284, %v286
      %v301 = vsel %vm289, %v286, %v288
      %v314 = vadd.f32 %v205, %v290
      %v315 = vadd.f32 %v206, %v291
      %v316 = vadd.f32 %v207, %v292
      %v317 = vadd.f32 %v208, %v293
      %v318 = vadd.f32 %v209, %v294
      %v319 = vadd.f32 %v210, %v295
      %v320 = vadd.f32 %v211, %v296
      %v321 = vadd.f32 %v212, %v297
      %v322 = vadd.f32 %v213, %v298
      %v323 = vadd.f32 %v214, %v299
      %v324 = vadd.f32 %v215, %v300
      %v325 = vadd.f32 %v216, %v301
      %326 = vset.pattern.permute.xlu0 3
      %327 = vperm.xlu0 %326, %v28
      %v328 = vpop.permute.xlu0 %327
      %330 = vset.pattern.permute.xlu0 3
      %331 = vperm.xlu0 %330, %v29
      %v332 = vpop.permute.xlu0 %331
      %334 = vset.pattern.permute.xlu0 3
      %335 = vperm.xlu0 %334, %v30
      %v336 = vpop.permute.xlu0 %335
      %v338 = vmul.f32 %v328, %v62
      %v339 = vmul.f32 %v328, %v66
      %v340 = vmul.f32 %v328, %v70
      %v341 = vmul.f32 %v328, %v74
      %v342 = vmul.f32 %v328, %v118
      %v343 = vmul.f32 %v332, %v62
      %v344 = vmul.f32 %v332, %v66
      %v345 = vmul.f32 %v332, %v70
      %v346 = vmul.f32 %v332, %v74
      %v347 = vmul.f32 %v332, %v118
      %v348 = vmul.f32 %v336, %v62
      %v349 = vmul.f32 %v336, %v66
      %v350 = vmul.f32 %v336, %v70
      %v351 = vmul.f32 %v336, %v74
      %v352 = vmul.f32 %v336, %v118
      %368 = vrot.lane.b32.xlu0 %v338, 125
      %v369 = vpop.permute.xlu0 %368
      %370 = vrot.lane.b32.xlu0 %v339, 125
      %v371 = vpop.permute.xlu0 %370
      %372 = vrot.lane.b32.xlu0 %v340, 125
      %v373 = vpop.permute.xlu0 %372
      %374 = vrot.lane.b32.xlu0 %v341, 125
      %v375 = vpop.permute.xlu0 %374
      %376 = vrot.lane.b32.xlu0 %v342, 125
      %v377 = vpop.permute.xlu0 %376
      %378 = vrot.lane.b32.xlu0 %v343, 125
      %v379 = vpop.permute.xlu0 %378
      %380 = vrot.lane.b32.xlu0 %v344, 125
      %v381 = vpop.permute.xlu0 %380
      %382 = vrot.lane.b32.xlu0 %v345, 125
      %v383 = vpop.permute.xlu0 %382
      %384 = vrot.lane.b32.xlu0 %v346, 125
      %v385 = vpop.permute.xlu0 %384
      %386 = vrot.lane.b32.xlu0 %v347, 125
      %v387 = vpop.permute.xlu0 %386
      %388 = vrot.lane.b32.xlu0 %v348, 125
      %v389 = vpop.permute.xlu0 %388
      %390 = vrot.lane.b32.xlu0 %v349, 125
      %v391 = vpop.permute.xlu0 %390
      %392 = vrot.lane.b32.xlu0 %v350, 125
      %v393 = vpop.permute.xlu0 %392
      %394 = vrot.lane.b32.xlu0 %v351, 125
      %v395 = vpop.permute.xlu0 %394
      %396 = vrot.lane.b32.xlu0 %v352, 125
      %v397 = vpop.permute.xlu0 %396
      %vm398 = vcmask 1022976
      %v399 = vsel %vm398, %v369, %v371
      %v400 = vsel %vm398, %v371, %v373
      %v401 = vsel %vm398, %v373, %v375
      %v402 = vsel %vm398, %v375, %v377
      %v403 = vsel %vm398, %v379, %v381
      %v404 = vsel %vm398, %v381, %v383
      %v405 = vsel %vm398, %v383, %v385
      %v406 = vsel %vm398, %v385, %v387
      %v407 = vsel %vm398, %v389, %v391
      %v408 = vsel %vm398, %v391, %v393
      %v409 = vsel %vm398, %v393, %v395
      %v410 = vsel %vm398, %v395, %v397
      %v423 = vadd.f32 %v314, %v399
      %v424 = vadd.f32 %v315, %v400
      %v425 = vadd.f32 %v316, %v401
      %v426 = vadd.f32 %v317, %v402
      %v427 = vadd.f32 %v318, %v403
      %v428 = vadd.f32 %v319, %v404
      %v429 = vadd.f32 %v320, %v405
      %v430 = vadd.f32 %v321, %v406
      %v431 = vadd.f32 %v322, %v407
      %v432 = vadd.f32 %v323, %v408
      %v433 = vadd.f32 %v324, %v409
      %v434 = vadd.f32 %v325, %v410
      %435 = vset.pattern.permute.xlu0 4
      %436 = vperm.xlu0 %435, %v28
      %v437 = vpop.permute.xlu0 %436
      %439 = vset.pattern.permute.xlu0 4
      %440 = vperm.xlu0 %439, %v29
      %v441 = vpop.permute.xlu0 %440
      %443 = vset.pattern.permute.xlu0 4
      %444 = vperm.xlu0 %443, %v30
      %v445 = vpop.permute.xlu0 %444
      %v447 = vmul.f32 %v437, %v62
      %v448 = vmul.f32 %v437, %v66
      %v449 = vmul.f32 %v437, %v70
      %v450 = vmul.f32 %v437, %v74
      %v451 = vmul.f32 %v437, %v118
      %v452 = vmul.f32 %v441, %v62
      %v453 = vmul.f32 %v441, %v66
      %v454 = vmul.f32 %v441, %v70
      %v455 = vmul.f32 %v441, %v74
      %v456 = vmul.f32 %v441, %v118
      %v457 = vmul.f32 %v445, %v62
      %v458 = vmul.f32 %v445, %v66
      %v459 = vmul.f32 %v445, %v70
      %v460 = vmul.f32 %v445, %v74
      %v461 = vmul.f32 %v445, %v118
      %477 = vrot.lane.b32.xlu0 %v447, 124
      %v478 = vpop.permute.xlu0 %477
      %479 = vrot.lane.b32.xlu0 %v448, 124
      %v480 = vpop.permute.xlu0 %479
      %481 = vrot.lane.b32.xlu0 %v449, 124
      %v482 = vpop.permute.xlu0 %481
      %483 = vrot.lane.b32.xlu0 %v450, 124
      %v484 = vpop.permute.xlu0 %483
      %485 = vrot.lane.b32.xlu0 %v451, 124
      %v486 = vpop.permute.xlu0 %485
      %487 = vrot.lane.b32.xlu0 %v452, 124
      %v488 = vpop.permute.xlu0 %487
      %489 = vrot.lane.b32.xlu0 %v453, 124
      %v490 = vpop.permute.xlu0 %489
      %491 = vrot.lane.b32.xlu0 %v454, 124
      %v492 = vpop.permute.xlu0 %491
      %493 = vrot.lane.b32.xlu0 %v455, 124
      %v494 = vpop.permute.xlu0 %493
      %495 = vrot.lane.b32.xlu0 %v456, 124
      %v496 = vpop.permute.xlu0 %495
      %497 = vrot.lane.b32.xlu0 %v457, 124
      %v498 = vpop.permute.xlu0 %497
      %499 = vrot.lane.b32.xlu0 %v458, 124
      %v500 = vpop.permute.xlu0 %499
      %501 = vrot.lane.b32.xlu0 %v459, 124
      %v502 = vpop.permute.xlu0 %501
      %503 = vrot.lane.b32.xlu0 %v460, 124
      %v504 = vpop.permute.xlu0 %503
      %505 = vrot.lane.b32.xlu0 %v461, 124
      %v506 = vpop.permute.xlu0 %505
      %vm507 = vcmask 1014784
      %v508 = vsel %vm507, %v478, %v480
      %v509 = vsel %vm507, %v480, %v482
      %v510 = vsel %vm507, %v482, %v484
      %v511 = vsel %vm507, %v484, %v486
      %v512 = vsel %vm507, %v488, %v490
      %v513 = vsel %vm507, %v490, %v492
      %v514 = vsel %vm507, %v492, %v494
      %v515 = vsel %vm507, %v494, %v496
      %v516 = vsel %vm507, %v498, %v500
      %v517 = vsel %vm507, %v500, %v502
      %v518 = vsel %vm507, %v502, %v504
      %v519 = vsel %vm507, %v504, %v506
      %v532 = vadd.f32 %v423, %v508
      %v533 = vadd.f32 %v424, %v509
      %v534 = vadd.f32 %v425, %v510
      %v535 = vadd.f32 %v426, %v511
      %v536 = vadd.f32 %v427, %v512
      %v537 = vadd.f32 %v428, %v513
      %v538 = vadd.f32 %v429, %v514
      %v539 = vadd.f32 %v430, %v515
      %v540 = vadd.f32 %v431, %v516
      %v541 = vadd.f32 %v432, %v517
      %v542 = vadd.f32 %v433, %v518
      %v543 = vadd.f32 %v434, %v519
      %544 = vset.pattern.permute.xlu0 5
      %545 = vperm.xlu0 %544, %v28
      %v546 = vpop.permute.xlu0 %545
      %548 = vset.pattern.permute.xlu0 5
      %549 = vperm.xlu0 %548, %v29
      %v550 = vpop.permute.xlu0 %549
      %552 = vset.pattern.permute.xlu0 5
      %553 = vperm.xlu0 %552, %v30
      %v554 = vpop.permute.xlu0 %553
      %v556 = vmul.f32 %v546, %v62
      %v557 = vmul.f32 %v546, %v66
      %v558 = vmul.f32 %v546, %v70
      %v559 = vmul.f32 %v546, %v74
      %v560 = vmul.f32 %v546, %v118
      %v561 = vmul.f32 %v550, %v62
      %v562 = vmul.f32 %v550, %v66
      %v563 = vmul.f32 %v550, %v70
      %v564 = vmul.f32 %v550, %v74
      %v565 = vmul.f32 %v550, %v118
      %v566 = vmul.f32 %v554, %v62
      %v567 = vmul.f32 %v554, %v66
      %v568 = vmul.f32 %v554, %v70
      %v569 = vmul.f32 %v554, %v74
      %v570 = vmul.f32 %v554, %v118
      %586 = vrot.lane.b32.xlu0 %v556, 123
      %v587 = vpop.permute.xlu0 %586
      %588 = vrot.lane.b32.xlu0 %v557, 123
      %v589 = vpop.permute.xlu0 %588
      %590 = vrot.lane.b32.xlu0 %v558, 123
      %v591 = vpop.permute.xlu0 %590
      %592 = vrot.lane.b32.xlu0 %v559, 123
      %v593 = vpop.permute.xlu0 %592
      %594 = vrot.lane.b32.xlu0 %v560, 123
      %v595 = vpop.permute.xlu0 %594
      %596 = vrot.lane.b32.xlu0 %v561, 123
      %v597 = vpop.permute.xlu0 %596
      %598 = vrot.lane.b32.xlu0 %v562, 123
      %v599 = vpop.permute.xlu0 %598
      %600 = vrot.lane.b32.xlu0 %v563, 123
      %v601 = vpop.permute.xlu0 %600
      %602 = vrot.lane.b32.xlu0 %v564, 123
      %v603 = vpop.permute.xlu0 %602
      %604 = vrot.lane.b32.xlu0 %v565, 123
      %v605 = vpop.permute.xlu0 %604
      %606 = vrot.lane.b32.xlu0 %v566, 123
      %v607 = vpop.permute.xlu0 %606
      %608 = vrot.lane.b32.xlu0 %v567, 123
      %v609 = vpop.permute.xlu0 %608
      %610 = vrot.lane.b32.xlu0 %v568, 123
      %v611 = vpop.permute.xlu0 %610
      %612 = vrot.lane.b32.xlu0 %v569, 123
      %v613 = vpop.permute.xlu0 %612
      %614 = vrot.lane.b32.xlu0 %v570, 123
      %v615 = vpop.permute.xlu0 %614
      %vm616 = vcmask 1006592
      %v617 = vsel %vm616, %v587, %v589
      %v618 = vsel %vm616, %v589, %v591
      %v619 = vsel %vm616, %v591, %v593
      %v620 = vsel %vm616, %v593, %v595
      %v621 = vsel %vm616, %v597, %v599
      %v622 = vsel %vm616, %v599, %v601
      %v623 = vsel %vm616, %v601, %v603
      %v624 = vsel %vm616, %v603, %v605
      %v625 = vsel %vm616, %v607, %v609
      %v626 = vsel %vm616, %v609, %v611
      %v627 = vsel %vm616, %v611, %v613
      %v628 = vsel %vm616, %v613, %v615
      %v641 = vadd.f32 %v532, %v617
      %v642 = vadd.f32 %v533, %v618
      %v643 = vadd.f32 %v534, %v619
      %v644 = vadd.f32 %v535, %v620
      %v645 = vadd.f32 %v536, %v621
      %v646 = vadd.f32 %v537, %v622
      %v647 = vadd.f32 %v538, %v623
      %v648 = vadd.f32 %v539, %v624
      %v649 = vadd.f32 %v540, %v625
      %v650 = vadd.f32 %v541, %v626
      %v651 = vadd.f32 %v542, %v627
      %v652 = vadd.f32 %v543, %v628
      %653 = vset.pattern.permute.xlu0 6
      %654 = vperm.xlu0 %653, %v28
      %v655 = vpop.permute.xlu0 %654
      %657 = vset.pattern.permute.xlu0 6
      %658 = vperm.xlu0 %657, %v29
      %v659 = vpop.permute.xlu0 %658
      %661 = vset.pattern.permute.xlu0 6
      %662 = vperm.xlu0 %661, %v30
      %v663 = vpop.permute.xlu0 %662
      %v665 = vmul.f32 %v655, %v62
      %v666 = vmul.f32 %v655, %v66
      %v667 = vmul.f32 %v655, %v70
      %v668 = vmul.f32 %v655, %v74
      %v669 = vmul.f32 %v655, %v118
      %v670 = vmul.f32 %v659, %v62
      %v671 = vmul.f32 %v659, %v66
      %v672 = vmul.f32 %v659, %v70
      %v673 = vmul.f32 %v659, %v74
      %v674 = vmul.f32 %v659, %v118
      %v675 = vmul.f32 %v663, %v62
      %v676 = vmul.f32 %v663, %v66
      %v677 = vmul.f32 %v663, %v70
      %v678 = vmul.f32 %v663, %v74
      %v679 = vmul.f32 %v663, %v118
      %695 = vrot.lane.b32.xlu0 %v665, 122
      %v696 = vpop.permute.xlu0 %695
      %697 = vrot.lane.b32.xlu0 %v666, 122
      %v698 = vpop.permute.xlu0 %697
      %699 = vrot.lane.b32.xlu0 %v667, 122
      %v700 = vpop.permute.xlu0 %699
      %701 = vrot.lane.b32.xlu0 %v668, 122
      %v702 = vpop.permute.xlu0 %701
      %703 = vrot.lane.b32.xlu0 %v669, 122
      %v704 = vpop.permute.xlu0 %703
      %705 = vrot.lane.b32.xlu0 %v670, 122
      %v706 = vpop.permute.xlu0 %705
      %707 = vrot.lane.b32.xlu0 %v671, 122
      %v708 = vpop.permute.xlu0 %707
      %709 = vrot.lane.b32.xlu0 %v672, 122
      %v710 = vpop.permute.xlu0 %709
      %711 = vrot.lane.b32.xlu0 %v673, 122
      %v712 = vpop.permute.xlu0 %711
      %713 = vrot.lane.b32.xlu0 %v674, 122
      %v714 = vpop.permute.xlu0 %713
      %715 = vrot.lane.b32.xlu0 %v675, 122
      %v716 = vpop.permute.xlu0 %715
      %717 = vrot.lane.b32.xlu0 %v676, 122
      %v718 = vpop.permute.xlu0 %717
      %719 = vrot.lane.b32.xlu0 %v677, 122
      %v720 = vpop.permute.xlu0 %719
      %721 = vrot.lane.b32.xlu0 %v678, 122
      %v722 = vpop.permute.xlu0 %721
      %723 = vrot.lane.b32.xlu0 %v679, 122
      %v724 = vpop.permute.xlu0 %723
      %vm725 = vcmask 998400
      %v726 = vsel %vm725, %v696, %v698
      %v727 = vsel %vm725, %v698, %v700
      %v728 = vsel %vm725, %v700, %v702
      %v729 = vsel %vm725, %v702, %v704
      %v730 = vsel %vm725, %v706, %v708
      %v731 = vsel %vm725, %v708, %v710
      %v732 = vsel %vm725, %v710, %v712
      %v733 = vsel %vm725, %v712, %v714
      %v734 = vsel %vm725, %v716, %v718
      %v735 = vsel %vm725, %v718, %v720
      %v736 = vsel %vm725, %v720, %v722
      %v737 = vsel %vm725, %v722, %v724
      %v750 = vadd.f32 %v641, %v726
      %v751 = vadd.f32 %v642, %v727
      %v752 = vadd.f32 %v643, %v728
      %v753 = vadd.f32 %v644, %v729
      %v754 = vadd.f32 %v645, %v730
      %v755 = vadd.f32 %v646, %v731
      %v756 = vadd.f32 %v647, %v732
      %v757 = vadd.f32 %v648, %v733
      %v758 = vadd.f32 %v649, %v734
      %v759 = vadd.f32 %v650, %v735
      %v760 = vadd.f32 %v651, %v736
      %v761 = vadd.f32 %v652, %v737
      %762 = vset.pattern.permute.xlu0 7
      %763 = vperm.xlu0 %762, %v28
      %v764 = vpop.permute.xlu0 %763
      %766 = vset.pattern.permute.xlu0 7
      %767 = vperm.xlu0 %766, %v29
      %v768 = vpop.permute.xlu0 %767
      %770 = vset.pattern.permute.xlu0 7
      %771 = vperm.xlu0 %770, %v30
      %v772 = vpop.permute.xlu0 %771
      %v774 = vmul.f32 %v764, %v62
      %v775 = vmul.f32 %v764, %v66
      %v776 = vmul.f32 %v764, %v70
      %v777 = vmul.f32 %v764, %v74
      %v778 = vmul.f32 %v764, %v118
      %v779 = vmul.f32 %v768, %v62
      %v780 = vmul.f32 %v768, %v66
      %v781 = vmul.f32 %v768, %v70
      %v782 = vmul.f32 %v768, %v74
      %v783 = vmul.f32 %v768, %v118
      %v784 = vmul.f32 %v772, %v62
      %v785 = vmul.f32 %v772, %v66
      %v786 = vmul.f32 %v772, %v70
      %v787 = vmul.f32 %v772, %v74
      %v788 = vmul.f32 %v772, %v118
      %804 = vrot.lane.b32.xlu0 %v774, 121
      %v805 = vpop.permute.xlu0 %804
      %806 = vrot.lane.b32.xlu0 %v775, 121
      %v807 = vpop.permute.xlu0 %806
      %808 = vrot.lane.b32.xlu0 %v776, 121
      %v809 = vpop.permute.xlu0 %808
      %810 = vrot.lane.b32.xlu0 %v777, 121
      %v811 = vpop.permute.xlu0 %810
      %812 = vrot.lane.b32.xlu0 %v778, 121
      %v813 = vpop.permute.xlu0 %812
      %814 = vrot.lane.b32.xlu0 %v779, 121
      %v815 = vpop.permute.xlu0 %814
      %816 = vrot.lane.b32.xlu0 %v780, 121
      %v817 = vpop.permute.xlu0 %816
      %818 = vrot.lane.b32.xlu0 %v781, 121
      %v819 = vpop.permute.xlu0 %818
      %820 = vrot.lane.b32.xlu0 %v782, 121
      %v821 = vpop.permute.xlu0 %820
      %822 = vrot.lane.b32.xlu0 %v783, 121
      %v823 = vpop.permute.xlu0 %822
      %824 = vrot.lane.b32.xlu0 %v784, 121
      %v825 = vpop.permute.xlu0 %824
      %826 = vrot.lane.b32.xlu0 %v785, 121
      %v827 = vpop.permute.xlu0 %826
      %828 = vrot.lane.b32.xlu0 %v786, 121
      %v829 = vpop.permute.xlu0 %828
      %830 = vrot.lane.b32.xlu0 %v787, 121
      %v831 = vpop.permute.xlu0 %830
      %832 = vrot.lane.b32.xlu0 %v788, 121
      %v833 = vpop.permute.xlu0 %832
      %vm834 = vcmask 990208
      %v835 = vsel %vm834, %v805, %v807
      %v836 = vsel %vm834, %v807, %v809
      %v837 = vsel %vm834, %v809, %v811
      %v838 = vsel %vm834, %v811, %v813
      %v839 = vsel %vm834, %v815, %v817
      %v840 = vsel %vm834, %v817, %v819
      %v841 = vsel %vm834, %v819, %v821
      %v842 = vsel %vm834, %v821, %v823
      %v843 = vsel %vm834, %v825, %v827
      %v844 = vsel %vm834, %v827, %v829
      %v845 = vsel %vm834, %v829, %v831
      %v846 = vsel %vm834, %v831, %v833
      %v859 = vadd.f32 %v750, %v835
      %v860 = vadd.f32 %v751, %v836
      %v861 = vadd.f32 %v752, %v837
      %v862 = vadd.f32 %v753, %v838
      %v863 = vadd.f32 %v754, %v839
      %v864 = vadd.f32 %v755, %v840
      %v865 = vadd.f32 %v756, %v841
      %v866 = vadd.f32 %v757, %v842
      %v867 = vadd.f32 %v758, %v843
      %v868 = vadd.f32 %v759, %v844
      %v869 = vadd.f32 %v760, %v845
      %v870 = vadd.f32 %v761, %v846
      %871 = vset.pattern.permute.xlu0 8
      %872 = vperm.xlu0 %871, %v28
      %v873 = vpop.permute.xlu0 %872
      %875 = vset.pattern.permute.xlu0 8
      %876 = vperm.xlu0 %875, %v29
      %v877 = vpop.permute.xlu0 %876
      %879 = vset.pattern.permute.xlu0 8
      %880 = vperm.xlu0 %879, %v30
      %v881 = vpop.permute.xlu0 %880
      %v883 = vmul.f32 %v873, %v62
      %v884 = vmul.f32 %v873, %v66
      %v885 = vmul.f32 %v873, %v70
      %v886 = vmul.f32 %v873, %v74
      %v887 = vmul.f32 %v873, %v118
      %v888 = vmul.f32 %v877, %v62
      %v889 = vmul.f32 %v877, %v66
      %v890 = vmul.f32 %v877, %v70
      %v891 = vmul.f32 %v877, %v74
      %v892 = vmul.f32 %v877, %v118
      %v893 = vmul.f32 %v881, %v62
      %v894 = vmul.f32 %v881, %v66
      %v895 = vmul.f32 %v881, %v70
      %v896 = vmul.f32 %v881, %v74
      %v897 = vmul.f32 %v881, %v118
      %913 = vrot.lane.b32.xlu0 %v883, 120
      %v914 = vpop.permute.xlu0 %913
      %915 = vrot.lane.b32.xlu0 %v884, 120
      %v916 = vpop.permute.xlu0 %915
      %917 = vrot.lane.b32.xlu0 %v885, 120
      %v918 = vpop.permute.xlu0 %917
      %919 = vrot.lane.b32.xlu0 %v886, 120
      %v920 = vpop.permute.xlu0 %919
      %921 = vrot.lane.b32.xlu0 %v887, 120
      %v922 = vpop.permute.xlu0 %921
      %923 = vrot.lane.b32.xlu0 %v888, 120
      %v924 = vpop.permute.xlu0 %923
      %925 = vrot.lane.b32.xlu0 %v889, 120
      %v926 = vpop.permute.xlu0 %925
      %927 = vrot.lane.b32.xlu0 %v890, 120
      %v928 = vpop.permute.xlu0 %927
      %929 = vrot.lane.b32.xlu0 %v891, 120
      %v930 = vpop.permute.xlu0 %929
      %931 = vrot.lane.b32.xlu0 %v892, 120
      %v932 = vpop.permute.xlu0 %931
      %933 = vrot.lane.b32.xlu0 %v893, 120
      %v934 = vpop.permute.xlu0 %933
      %935 = vrot.lane.b32.xlu0 %v894, 120
      %v936 = vpop.permute.xlu0 %935
      %937 = vrot.lane.b32.xlu0 %v895, 120
      %v938 = vpop.permute.xlu0 %937
      %939 = vrot.lane.b32.xlu0 %v896, 120
      %v940 = vpop.permute.xlu0 %939
      %941 = vrot.lane.b32.xlu0 %v897, 120
      %v942 = vpop.permute.xlu0 %941
      %vm943 = vcmask 982016
      %v944 = vsel %vm943, %v914, %v916
      %v945 = vsel %vm943, %v916, %v918
      %v946 = vsel %vm943, %v918, %v920
      %v947 = vsel %vm943, %v920, %v922
      %v948 = vsel %vm943, %v924, %v926
      %v949 = vsel %vm943, %v926, %v928
      %v950 = vsel %vm943, %v928, %v930
      %v951 = vsel %vm943, %v930, %v932
      %v952 = vsel %vm943, %v934, %v936
      %v953 = vsel %vm943, %v936, %v938
      %v954 = vsel %vm943, %v938, %v940
      %v955 = vsel %vm943, %v940, %v942
      %v968 = vadd.f32 %v859, %v944
      %v969 = vadd.f32 %v860, %v945
      %v970 = vadd.f32 %v861, %v946
      %v971 = vadd.f32 %v862, %v947
      %v972 = vadd.f32 %v863, %v948
      %v973 = vadd.f32 %v864, %v949
      %v974 = vadd.f32 %v865, %v950
      %v975 = vadd.f32 %v866, %v951
      %v976 = vadd.f32 %v867, %v952
      %v977 = vadd.f32 %v868, %v953
      %v978 = vadd.f32 %v869, %v954
      %v979 = vadd.f32 %v870, %v955
      %980 = vset.pattern.permute.xlu0 9
      %981 = vperm.xlu0 %980, %v28
      %v982 = vpop.permute.xlu0 %981
      %984 = vset.pattern.permute.xlu0 9
      %985 = vperm.xlu0 %984, %v29
      %v986 = vpop.permute.xlu0 %985
      %988 = vset.pattern.permute.xlu0 9
      %989 = vperm.xlu0 %988, %v30
      %v990 = vpop.permute.xlu0 %989
      %v992 = vmul.f32 %v982, %v62
      %v993 = vmul.f32 %v982, %v66
      %v994 = vmul.f32 %v982, %v70
      %v995 = vmul.f32 %v982, %v74
      %v996 = vmul.f32 %v982, %v118
      %v997 = vmul.f32 %v986, %v62
      %v998 = vmul.f32 %v986, %v66
      %v999 = vmul.f32 %v986, %v70
      %v1000 = vmul.f32 %v986, %v74
      %v1001 = vmul.f32 %v986, %v118
      %v1002 = vmul.f32 %v990, %v62
      %v1003 = vmul.f32 %v990, %v66
      %v1004 = vmul.f32 %v990, %v70
      %v1005 = vmul.f32 %v990, %v74
      %v1006 = vmul.f32 %v990, %v118
      %1022 = vrot.lane.b32.xlu0 %v992, 119
      %v1023 = vpop.permute.xlu0 %1022
      %1024 = vrot.lane.b32.xlu0 %v993, 119
      %v1025 = vpop.permute.xlu0 %1024
      %1026 = vrot.lane.b32.xlu0 %v994, 119
      %v1027 = vpop.permute.xlu0 %1026
      %1028 = vrot.lane.b32.xlu0 %v995, 119
      %v1029 = vpop.permute.xlu0 %1028
      %1030 = vrot.lane.b32.xlu0 %v996, 119
      %v1031 = vpop.permute.xlu0 %1030
      %1032 = vrot.lane.b32.xlu0 %v997, 119
      %v1033 = vpop.permute.xlu0 %1032
      %1034 = vrot.lane.b32.xlu0 %v998, 119
      %v1035 = vpop.permute.xlu0 %1034
      %1036 = vrot.lane.b32.xlu0 %v999, 119
      %v1037 = vpop.permute.xlu0 %1036
      %1038 = vrot.lane.b32.xlu0 %v1000, 119
      %v1039 = vpop.permute.xlu0 %1038
      %1040 = vrot.lane.b32.xlu0 %v1001, 119
      %v1041 = vpop.permute.xlu0 %1040
      %1042 = vrot.lane.b32.xlu0 %v1002, 119
      %v1043 = vpop.permute.xlu0 %1042
      %1044 = vrot.lane.b32.xlu0 %v1003, 119
      %v1045 = vpop.permute.xlu0 %1044
      %1046 = vrot.lane.b32.xlu0 %v1004, 119
      %v1047 = vpop.permute.xlu0 %1046
      %1048 = vrot.lane.b32.xlu0 %v1005, 119
      %v1049 = vpop.permute.xlu0 %1048
      %1050 = vrot.lane.b32.xlu0 %v1006, 119
      %v1051 = vpop.permute.xlu0 %1050
      %vm1052 = vcmask 973824
      %v1053 = vsel %vm1052, %v1023, %v1025
      %v1054 = vsel %vm1052, %v1025, %v1027
      %v1055 = vsel %vm1052, %v1027, %v1029
      %v1056 = vsel %vm1052, %v1029, %v1031
      %v1057 = vsel %vm1052, %v1033, %v1035
      %v1058 = vsel %vm1052, %v1035, %v1037
      %v1059 = vsel %vm1052, %v1037, %v1039
      %v1060 = vsel %vm1052, %v1039, %v1041
      %v1061 = vsel %vm1052, %v1043, %v1045
      %v1062 = vsel %vm1052, %v1045, %v1047
      %v1063 = vsel %vm1052, %v1047, %v1049
      %v1064 = vsel %vm1052, %v1049, %v1051
      %v1077 = vadd.f32 %v968, %v1053
      %v1078 = vadd.f32 %v969, %v1054
      %v1079 = vadd.f32 %v970, %v1055
      %v1080 = vadd.f32 %v971, %v1056
      %v1081 = vadd.f32 %v972, %v1057
      %v1082 = vadd.f32 %v973, %v1058
      %v1083 = vadd.f32 %v974, %v1059
      %v1084 = vadd.f32 %v975, %v1060
      %v1085 = vadd.f32 %v976, %v1061
      %v1086 = vadd.f32 %v977, %v1062
      %v1087 = vadd.f32 %v978, %v1063
      %v1088 = vadd.f32 %v979, %v1064
      %1089 = vset.pattern.permute.xlu0 10
      %1090 = vperm.xlu0 %1089, %v28
      %v1091 = vpop.permute.xlu0 %1090
      %1093 = vset.pattern.permute.xlu0 10
      %1094 = vperm.xlu0 %1093, %v29
      %v1095 = vpop.permute.xlu0 %1094
      %1097 = vset.pattern.permute.xlu0 10
      %1098 = vperm.xlu0 %1097, %v30
      %v1099 = vpop.permute.xlu0 %1098
      %v1101 = vmul.f32 %v1091, %v62
      %v1102 = vmul.f32 %v1091, %v66
      %v1103 = vmul.f32 %v1091, %v70
      %v1104 = vmul.f32 %v1091, %v74
      %v1105 = vmul.f32 %v1091, %v118
      %v1106 = vmul.f32 %v1095, %v62
      %v1107 = vmul.f32 %v1095, %v66
      %v1108 = vmul.f32 %v1095, %v70
      %v1109 = vmul.f32 %v1095, %v74
      %v1110 = vmul.f32 %v1095, %v118
      %v1111 = vmul.f32 %v1099, %v62
      %v1112 = vmul.f32 %v1099, %v66
      %v1113 = vmul.f32 %v1099, %v70
      %v1114 = vmul.f32 %v1099, %v74
      %v1115 = vmul.f32 %v1099, %v118
      %1131 = vrot.lane.b32.xlu0 %v1101, 118
      %v1132 = vpop.permute.xlu0 %1131
      %1133 = vrot.lane.b32.xlu0 %v1102, 118
      %v1134 = vpop.permute.xlu0 %1133
      %1135 = vrot.lane.b32.xlu0 %v1103, 118
      %v1136 = vpop.permute.xlu0 %1135
      %1137 = vrot.lane.b32.xlu0 %v1104, 118
      %v1138 = vpop.permute.xlu0 %1137
      %1139 = vrot.lane.b32.xlu0 %v1105, 118
      %v1140 = vpop.permute.xlu0 %1139
      %1141 = vrot.lane.b32.xlu0 %v1106, 118
      %v1142 = vpop.permute.xlu0 %1141
      %1143 = vrot.lane.b32.xlu0 %v1107, 118
      %v1144 = vpop.permute.xlu0 %1143
      %1145 = vrot.lane.b32.xlu0 %v1108, 118
      %v1146 = vpop.permute.xlu0 %1145
      %1147 = vrot.lane.b32.xlu0 %v1109, 118
      %v1148 = vpop.permute.xlu0 %1147
      %1149 = vrot.lane.b32.xlu0 %v1110, 118
      %v1150 = vpop.permute.xlu0 %1149
      %1151 = vrot.lane.b32.xlu0 %v1111, 118
      %v1152 = vpop.permute.xlu0 %1151
      %1153 = vrot.lane.b32.xlu0 %v1112, 118
      %v1154 = vpop.permute.xlu0 %1153
      %1155 = vrot.lane.b32.xlu0 %v1113, 118
      %v1156 = vpop.permute.xlu0 %1155
      %1157 = vrot.lane.b32.xlu0 %v1114, 118
      %v1158 = vpop.permute.xlu0 %1157
      %1159 = vrot.lane.b32.xlu0 %v1115, 118
      %v1160 = vpop.permute.xlu0 %1159
      %vm1161 = vcmask 965632
      %v1162 = vsel %vm1161, %v1132, %v1134
      %v1163 = vsel %vm1161, %v1134, %v1136
      %v1164 = vsel %vm1161, %v1136, %v1138
      %v1165 = vsel %vm1161, %v1138, %v1140
      %v1166 = vsel %vm1161, %v1142, %v1144
      %v1167 = vsel %vm1161, %v1144, %v1146
      %v1168 = vsel %vm1161, %v1146, %v1148
      %v1169 = vsel %vm1161, %v1148, %v1150
      %v1170 = vsel %vm1161, %v1152, %v1154
      %v1171 = vsel %vm1161, %v1154, %v1156
      %v1172 = vsel %vm1161, %v1156, %v1158
      %v1173 = vsel %vm1161, %v1158, %v1160
      %v1186 = vadd.f32 %v1077, %v1162
      %v1187 = vadd.f32 %v1078, %v1163
      %v1188 = vadd.f32 %v1079, %v1164
      %v1189 = vadd.f32 %v1080, %v1165
      %v1190 = vadd.f32 %v1081, %v1166
      %v1191 = vadd.f32 %v1082, %v1167
      %v1192 = vadd.f32 %v1083, %v1168
      %v1193 = vadd.f32 %v1084, %v1169
      %v1194 = vadd.f32 %v1085, %v1170
      %v1195 = vadd.f32 %v1086, %v1171
      %v1196 = vadd.f32 %v1087, %v1172
      %v1197 = vadd.f32 %v1088, %v1173
      %1198 = vset.pattern.permute.xlu0 11
      %1199 = vperm.xlu0 %1198, %v28
      %v1200 = vpop.permute.xlu0 %1199
      %1202 = vset.pattern.permute.xlu0 11
      %1203 = vperm.xlu0 %1202, %v29
      %v1204 = vpop.permute.xlu0 %1203
      %1206 = vset.pattern.permute.xlu0 11
      %1207 = vperm.xlu0 %1206, %v30
      %v1208 = vpop.permute.xlu0 %1207
      %v1210 = vmul.f32 %v1200, %v62
      %v1211 = vmul.f32 %v1200, %v66
      %v1212 = vmul.f32 %v1200, %v70
      %v1213 = vmul.f32 %v1200, %v74
      %v1214 = vmul.f32 %v1200, %v118
      %v1215 = vmul.f32 %v1204, %v62
      %v1216 = vmul.f32 %v1204, %v66
      %v1217 = vmul.f32 %v1204, %v70
      %v1218 = vmul.f32 %v1204, %v74
      %v1219 = vmul.f32 %v1204, %v118
      %v1220 = vmul.f32 %v1208, %v62
      %v1221 = vmul.f32 %v1208, %v66
      %v1222 = vmul.f32 %v1208, %v70
      %v1223 = vmul.f32 %v1208, %v74
      %v1224 = vmul.f32 %v1208, %v118
      %1240 = vrot.lane.b32.xlu0 %v1210, 117
      %v1241 = vpop.permute.xlu0 %1240
      %1242 = vrot.lane.b32.xlu0 %v1211, 117
      %v1243 = vpop.permute.xlu0 %1242
      %1244 = vrot.lane.b32.xlu0 %v1212, 117
      %v1245 = vpop.permute.xlu0 %1244
      %1246 = vrot.lane.b32.xlu0 %v1213, 117
      %v1247 = vpop.permute.xlu0 %1246
      %1248 = vrot.lane.b32.xlu0 %v1214, 117
      %v1249 = vpop.permute.xlu0 %1248
      %1250 = vrot.lane.b32.xlu0 %v1215, 117
      %v1251 = vpop.permute.xlu0 %1250
      %1252 = vrot.lane.b32.xlu0 %v1216, 117
      %v1253 = vpop.permute.xlu0 %1252
      %1254 = vrot.lane.b32.xlu0 %v1217, 117
      %v1255 = vpop.permute.xlu0 %1254
      %1256 = vrot.lane.b32.xlu0 %v1218, 117
      %v1257 = vpop.permute.xlu0 %1256
      %1258 = vrot.lane.b32.xlu0 %v1219, 117
      %v1259 = vpop.permute.xlu0 %1258
      %1260 = vrot.lane.b32.xlu0 %v1220, 117
      %v1261 = vpop.permute.xlu0 %1260
      %1262 = vrot.lane.b32.xlu0 %v1221, 117
      %v1263 = vpop.permute.xlu0 %1262
      %1264 = vrot.lane.b32.xlu0 %v1222, 117
      %v1265 = vpop.permute.xlu0 %1264
      %1266 = vrot.lane.b32.xlu0 %v1223, 117
      %v1267 = vpop.permute.xlu0 %1266
      %1268 = vrot.lane.b32.xlu0 %v1224, 117
      %v1269 = vpop.permute.xlu0 %1268
      %vm1270 = vcmask 957440
      %v1271 = vsel %vm1270, %v1241, %v1243
      %v1272 = vsel %vm1270, %v1243, %v1245
      %v1273 = vsel %vm1270, %v1245, %v1247
      %v1274 = vsel %vm1270, %v1247, %v1249
      %v1275 = vsel %vm1270, %v1251, %v1253
      %v1276 = vsel %vm1270, %v1253, %v1255
      %v1277 = vsel %vm1270, %v1255, %v1257
      %v1278 = vsel %vm1270, %v1257, %v1259
      %v1279 = vsel %vm1270, %v1261, %v1263
      %v1280 = vsel %vm1270, %v1263, %v1265
      %v1281 = vsel %vm1270, %v1265, %v1267
      %v1282 = vsel %vm1270, %v1267, %v1269
      %v1295 = vadd.f32 %v1186, %v1271
      %v1296 = vadd.f32 %v1187, %v1272
      %v1297 = vadd.f32 %v1188, %v1273
      %v1298 = vadd.f32 %v1189, %v1274
      %v1299 = vadd.f32 %v1190, %v1275
      %v1300 = vadd.f32 %v1191, %v1276
      %v1301 = vadd.f32 %v1192, %v1277
      %v1302 = vadd.f32 %v1193, %v1278
      %v1303 = vadd.f32 %v1194, %v1279
      %v1304 = vadd.f32 %v1195, %v1280
      %v1305 = vadd.f32 %v1196, %v1281
      %v1306 = vadd.f32 %v1197, %v1282
      %1307 = vset.pattern.permute.xlu0 12
      %1308 = vperm.xlu0 %1307, %v28
      %v1309 = vpop.permute.xlu0 %1308
      %1311 = vset.pattern.permute.xlu0 12
      %1312 = vperm.xlu0 %1311, %v29
      %v1313 = vpop.permute.xlu0 %1312
      %1315 = vset.pattern.permute.xlu0 12
      %1316 = vperm.xlu0 %1315, %v30
      %v1317 = vpop.permute.xlu0 %1316
      %v1319 = vmul.f32 %v1309, %v62
      %v1320 = vmul.f32 %v1309, %v66
      %v1321 = vmul.f32 %v1309, %v70
      %v1322 = vmul.f32 %v1309, %v74
      %v1323 = vmul.f32 %v1309, %v118
      %v1324 = vmul.f32 %v1313, %v62
      %v1325 = vmul.f32 %v1313, %v66
      %v1326 = vmul.f32 %v1313, %v70
      %v1327 = vmul.f32 %v1313, %v74
      %v1328 = vmul.f32 %v1313, %v118
      %v1329 = vmul.f32 %v1317, %v62
      %v1330 = vmul.f32 %v1317, %v66
      %v1331 = vmul.f32 %v1317, %v70
      %v1332 = vmul.f32 %v1317, %v74
      %v1333 = vmul.f32 %v1317, %v118
      %1349 = vrot.lane.b32.xlu0 %v1319, 116
      %v1350 = vpop.permute.xlu0 %1349
      %1351 = vrot.lane.b32.xlu0 %v1320, 116
      %v1352 = vpop.permute.xlu0 %1351
      %1353 = vrot.lane.b32.xlu0 %v1321, 116
      %v1354 = vpop.permute.xlu0 %1353
      %1355 = vrot.lane.b32.xlu0 %v1322, 116
      %v1356 = vpop.permute.xlu0 %1355
      %1357 = vrot.lane.b32.xlu0 %v1323, 116
      %v1358 = vpop.permute.xlu0 %1357
      %1359 = vrot.lane.b32.xlu0 %v1324, 116
      %v1360 = vpop.permute.xlu0 %1359
      %1361 = vrot.lane.b32.xlu0 %v1325, 116
      %v1362 = vpop.permute.xlu0 %1361
      %1363 = vrot.lane.b32.xlu0 %v1326, 116
      %v1364 = vpop.permute.xlu0 %1363
      %1365 = vrot.lane.b32.xlu0 %v1327, 116
      %v1366 = vpop.permute.xlu0 %1365
      %1367 = vrot.lane.b32.xlu0 %v1328, 116
      %v1368 = vpop.permute.xlu0 %1367
      %1369 = vrot.lane.b32.xlu0 %v1329, 116
      %v1370 = vpop.permute.xlu0 %1369
      %1371 = vrot.lane.b32.xlu0 %v1330, 116
      %v1372 = vpop.permute.xlu0 %1371
      %1373 = vrot.lane.b32.xlu0 %v1331, 116
      %v1374 = vpop.permute.xlu0 %1373
      %1375 = vrot.lane.b32.xlu0 %v1332, 116
      %v1376 = vpop.permute.xlu0 %1375
      %1377 = vrot.lane.b32.xlu0 %v1333, 116
      %v1378 = vpop.permute.xlu0 %1377
      %vm1379 = vcmask 949248
      %v1380 = vsel %vm1379, %v1350, %v1352
      %v1381 = vsel %vm1379, %v1352, %v1354
      %v1382 = vsel %vm1379, %v1354, %v1356
      %v1383 = vsel %vm1379, %v1356, %v1358
      %v1384 = vsel %vm1379, %v1360, %v1362
      %v1385 = vsel %vm1379, %v1362, %v1364
      %v1386 = vsel %vm1379, %v1364, %v1366
      %v1387 = vsel %vm1379, %v1366, %v1368
      %v1388 = vsel %vm1379, %v1370, %v1372
      %v1389 = vsel %vm1379, %v1372, %v1374
      %v1390 = vsel %vm1379, %v1374, %v1376
      %v1391 = vsel %vm1379, %v1376, %v1378
      %v1404 = vadd.f32 %v1295, %v1380
      %v1405 = vadd.f32 %v1296, %v1381
      %v1406 = vadd.f32 %v1297, %v1382
      %v1407 = vadd.f32 %v1298, %v1383
      %v1408 = vadd.f32 %v1299, %v1384
      %v1409 = vadd.f32 %v1300, %v1385
      %v1410 = vadd.f32 %v1301, %v1386
      %v1411 = vadd.f32 %v1302, %v1387
      %v1412 = vadd.f32 %v1303, %v1388
      %v1413 = vadd.f32 %v1304, %v1389
      %v1414 = vadd.f32 %v1305, %v1390
      %v1415 = vadd.f32 %v1306, %v1391
      %1416 = vset.pattern.permute.xlu0 13
      %1417 = vperm.xlu0 %1416, %v28
      %v1418 = vpop.permute.xlu0 %1417
      %1420 = vset.pattern.permute.xlu0 13
      %1421 = vperm.xlu0 %1420, %v29
      %v1422 = vpop.permute.xlu0 %1421
      %1424 = vset.pattern.permute.xlu0 13
      %1425 = vperm.xlu0 %1424, %v30
      %v1426 = vpop.permute.xlu0 %1425
      %v1428 = vmul.f32 %v1418, %v62
      %v1429 = vmul.f32 %v1418, %v66
      %v1430 = vmul.f32 %v1418, %v70
      %v1431 = vmul.f32 %v1418, %v74
      %v1432 = vmul.f32 %v1418, %v118
      %v1433 = vmul.f32 %v1422, %v62
      %v1434 = vmul.f32 %v1422, %v66
      %v1435 = vmul.f32 %v1422, %v70
      %v1436 = vmul.f32 %v1422, %v74
      %v1437 = vmul.f32 %v1422, %v118
      %v1438 = vmul.f32 %v1426, %v62
      %v1439 = vmul.f32 %v1426, %v66
      %v1440 = vmul.f32 %v1426, %v70
      %v1441 = vmul.f32 %v1426, %v74
      %v1442 = vmul.f32 %v1426, %v118
      %1458 = vrot.lane.b32.xlu0 %v1428, 115
      %v1459 = vpop.permute.xlu0 %1458
      %1460 = vrot.lane.b32.xlu0 %v1429, 115
      %v1461 = vpop.permute.xlu0 %1460
      %1462 = vrot.lane.b32.xlu0 %v1430, 115
      %v1463 = vpop.permute.xlu0 %1462
      %1464 = vrot.lane.b32.xlu0 %v1431, 115
      %v1465 = vpop.permute.xlu0 %1464
      %1466 = vrot.lane.b32.xlu0 %v1432, 115
      %v1467 = vpop.permute.xlu0 %1466
      %1468 = vrot.lane.b32.xlu0 %v1433, 115
      %v1469 = vpop.permute.xlu0 %1468
      %1470 = vrot.lane.b32.xlu0 %v1434, 115
      %v1471 = vpop.permute.xlu0 %1470
      %1472 = vrot.lane.b32.xlu0 %v1435, 115
      %v1473 = vpop.permute.xlu0 %1472
      %1474 = vrot.lane.b32.xlu0 %v1436, 115
      %v1475 = vpop.permute.xlu0 %1474
      %1476 = vrot.lane.b32.xlu0 %v1437, 115
      %v1477 = vpop.permute.xlu0 %1476
      %1478 = vrot.lane.b32.xlu0 %v1438, 115
      %v1479 = vpop.permute.xlu0 %1478
      %1480 = vrot.lane.b32.xlu0 %v1439, 115
      %v1481 = vpop.permute.xlu0 %1480
      %1482 = vrot.lane.b32.xlu0 %v1440, 115
      %v1483 = vpop.permute.xlu0 %1482
      %1484 = vrot.lane.b32.xlu0 %v1441, 115
      %v1485 = vpop.permute.xlu0 %1484
      %1486 = vrot.lane.b32.xlu0 %v1442, 115
      %v1487 = vpop.permute.xlu0 %1486
      %vm1488 = vcmask 941056
      %v1489 = vsel %vm1488, %v1459, %v1461
      %v1490 = vsel %vm1488, %v1461, %v1463
      %v1491 = vsel %vm1488, %v1463, %v1465
      %v1492 = vsel %vm1488, %v1465, %v1467
      %v1493 = vsel %vm1488, %v1469, %v1471
      %v1494 = vsel %vm1488, %v1471, %v1473
      %v1495 = vsel %vm1488, %v1473, %v1475
      %v1496 = vsel %vm1488, %v1475, %v1477
      %v1497 = vsel %vm1488, %v1479, %v1481
      %v1498 = vsel %vm1488, %v1481, %v1483
      %v1499 = vsel %vm1488, %v1483, %v1485
      %v1500 = vsel %vm1488, %v1485, %v1487
      %v1513 = vadd.f32 %v1404, %v1489
      %v1514 = vadd.f32 %v1405, %v1490
      %v1515 = vadd.f32 %v1406, %v1491
      %v1516 = vadd.f32 %v1407, %v1492
      %v1517 = vadd.f32 %v1408, %v1493
      %v1518 = vadd.f32 %v1409, %v1494
      %v1519 = vadd.f32 %v1410, %v1495
      %v1520 = vadd.f32 %v1411, %v1496
      %v1521 = vadd.f32 %v1412, %v1497
      %v1522 = vadd.f32 %v1413, %v1498
      %v1523 = vadd.f32 %v1414, %v1499
      %v1524 = vadd.f32 %v1415, %v1500
      %1525 = vset.pattern.permute.xlu0 14
      %1526 = vperm.xlu0 %1525, %v28
      %v1527 = vpop.permute.xlu0 %1526
      %1529 = vset.pattern.permute.xlu0 14
      %1530 = vperm.xlu0 %1529, %v29
      %v1531 = vpop.permute.xlu0 %1530
      %1533 = vset.pattern.permute.xlu0 14
      %1534 = vperm.xlu0 %1533, %v30
      %v1535 = vpop.permute.xlu0 %1534
      %v1537 = vmul.f32 %v1527, %v62
      %v1538 = vmul.f32 %v1527, %v66
      %v1539 = vmul.f32 %v1527, %v70
      %v1540 = vmul.f32 %v1527, %v74
      %v1541 = vmul.f32 %v1527, %v118
      %v1542 = vmul.f32 %v1531, %v62
      %v1543 = vmul.f32 %v1531, %v66
      %v1544 = vmul.f32 %v1531, %v70
      %v1545 = vmul.f32 %v1531, %v74
      %v1546 = vmul.f32 %v1531, %v118
      %v1547 = vmul.f32 %v1535, %v62
      %v1548 = vmul.f32 %v1535, %v66
      %v1549 = vmul.f32 %v1535, %v70
      %v1550 = vmul.f32 %v1535, %v74
      %v1551 = vmul.f32 %v1535, %v118
      %1567 = vrot.lane.b32.xlu0 %v1537, 114
      %v1568 = vpop.permute.xlu0 %1567
      %1569 = vrot.lane.b32.xlu0 %v1538, 114
      %v1570 = vpop.permute.xlu0 %1569
      %1571 = vrot.lane.b32.xlu0 %v1539, 114
      %v1572 = vpop.permute.xlu0 %1571
      %1573 = vrot.lane.b32.xlu0 %v1540, 114
      %v1574 = vpop.permute.xlu0 %1573
      %1575 = vrot.lane.b32.xlu0 %v1541, 114
      %v1576 = vpop.permute.xlu0 %1575
      %1577 = vrot.lane.b32.xlu0 %v1542, 114
      %v1578 = vpop.permute.xlu0 %1577
      %1579 = vrot.lane.b32.xlu0 %v1543, 114
      %v1580 = vpop.permute.xlu0 %1579
      %1581 = vrot.lane.b32.xlu0 %v1544, 114
      %v1582 = vpop.permute.xlu0 %1581
      %1583 = vrot.lane.b32.xlu0 %v1545, 114
      %v1584 = vpop.permute.xlu0 %1583
      %1585 = vrot.lane.b32.xlu0 %v1546, 114
      %v1586 = vpop.permute.xlu0 %1585
      %1587 = vrot.lane.b32.xlu0 %v1547, 114
      %v1588 = vpop.permute.xlu0 %1587
      %1589 = vrot.lane.b32.xlu0 %v1548, 114
      %v1590 = vpop.permute.xlu0 %1589
      %1591 = vrot.lane.b32.xlu0 %v1549, 114
      %v1592 = vpop.permute.xlu0 %1591
      %1593 = vrot.lane.b32.xlu0 %v1550, 114
      %v1594 = vpop.permute.xlu0 %1593
      %1595 = vrot.lane.b32.xlu0 %v1551, 114
      %v1596 = vpop.permute.xlu0 %1595
      %vm1597 = vcmask 932864
      %v1598 = vsel %vm1597, %v1568, %v1570
      %v1599 = vsel %vm1597, %v1570, %v1572
      %v1600 = vsel %vm1597, %v1572, %v1574
      %v1601 = vsel %vm1597, %v1574, %v1576
      %v1602 = vsel %vm1597, %v1578, %v1580
      %v1603 = vsel %vm1597, %v1580, %v1582
      %v1604 = vsel %vm1597, %v1582, %v1584
      %v1605 = vsel %vm1597, %v1584, %v1586
      %v1606 = vsel %vm1597, %v1588, %v1590
      %v1607 = vsel %vm1597, %v1590, %v1592
      %v1608 = vsel %vm1597, %v1592, %v1594
      %v1609 = vsel %vm1597, %v1594, %v1596
      %v1622 = vadd.f32 %v1513, %v1598
      %v1623 = vadd.f32 %v1514, %v1599
      %v1624 = vadd.f32 %v1515, %v1600
      %v1625 = vadd.f32 %v1516, %v1601
      %v1626 = vadd.f32 %v1517, %v1602
      %v1627 = vadd.f32 %v1518, %v1603
      %v1628 = vadd.f32 %v1519, %v1604
      %v1629 = vadd.f32 %v1520, %v1605
      %v1630 = vadd.f32 %v1521, %v1606
      %v1631 = vadd.f32 %v1522, %v1607
      %v1632 = vadd.f32 %v1523, %v1608
      %v1633 = vadd.f32 %v1524, %v1609
      %1634 = vset.pattern.permute.xlu0 15
      %1635 = vperm.xlu0 %1634, %v28
      %v1636 = vpop.permute.xlu0 %1635
      %1638 = vset.pattern.permute.xlu0 15
      %1639 = vperm.xlu0 %1638, %v29
      %v1640 = vpop.permute.xlu0 %1639
      %1642 = vset.pattern.permute.xlu0 15
      %1643 = vperm.xlu0 %1642, %v30
      %v1644 = vpop.permute.xlu0 %1643
      %v1646 = vmul.f32 %v1636, %v62
      %v1647 = vmul.f32 %v1636, %v66
      %v1648 = vmul.f32 %v1636, %v70
      %v1649 = vmul.f32 %v1636, %v74
      %v1650 = vmul.f32 %v1636, %v118
      %v1651 = vmul.f32 %v1640, %v62
      %v1652 = vmul.f32 %v1640, %v66
      %v1653 = vmul.f32 %v1640, %v70
      %v1654 = vmul.f32 %v1640, %v74
      %v1655 = vmul.f32 %v1640, %v118
      %v1656 = vmul.f32 %v1644, %v62
      %v1657 = vmul.f32 %v1644, %v66
      %v1658 = vmul.f32 %v1644, %v70
      %v1659 = vmul.f32 %v1644, %v74
      %v1660 = vmul.f32 %v1644, %v118
      %1676 = vrot.lane.b32.xlu0 %v1646, 113
      %v1677 = vpop.permute.xlu0 %1676
      %1678 = vrot.lane.b32.xlu0 %v1647, 113
      %v1679 = vpop.permute.xlu0 %1678
      %1680 = vrot.lane.b32.xlu0 %v1648, 113
      %v1681 = vpop.permute.xlu0 %1680
      %1682 = vrot.lane.b32.xlu0 %v1649, 113
      %v1683 = vpop.permute.xlu0 %1682
      %1684 = vrot.lane.b32.xlu0 %v1650, 113
      %v1685 = vpop.permute.xlu0 %1684
      %1686 = vrot.lane.b32.xlu0 %v1651, 113
      %v1687 = vpop.permute.xlu0 %1686
      %1688 = vrot.lane.b32.xlu0 %v1652, 113
      %v1689 = vpop.permute.xlu0 %1688
      %1690 = vrot.lane.b32.xlu0 %v1653, 113
      %v1691 = vpop.permute.xlu0 %1690
      %1692 = vrot.lane.b32.xlu0 %v1654, 113
      %v1693 = vpop.permute.xlu0 %1692
      %1694 = vrot.lane.b32.xlu0 %v1655, 113
      %v1695 = vpop.permute.xlu0 %1694
      %1696 = vrot.lane.b32.xlu0 %v1656, 113
      %v1697 = vpop.permute.xlu0 %1696
      %1698 = vrot.lane.b32.xlu0 %v1657, 113
      %v1699 = vpop.permute.xlu0 %1698
      %1700 = vrot.lane.b32.xlu0 %v1658, 113
      %v1701 = vpop.permute.xlu0 %1700
      %1702 = vrot.lane.b32.xlu0 %v1659, 113
      %v1703 = vpop.permute.xlu0 %1702
      %1704 = vrot.lane.b32.xlu0 %v1660, 113
      %v1705 = vpop.permute.xlu0 %1704
      %vm1706 = vcmask 924672
      %v1707 = vsel %vm1706, %v1677, %v1679
      %v1708 = vsel %vm1706, %v1679, %v1681
      %v1709 = vsel %vm1706, %v1681, %v1683
      %v1710 = vsel %vm1706, %v1683, %v1685
      %v1711 = vsel %vm1706, %v1687, %v1689
      %v1712 = vsel %vm1706, %v1689, %v1691
      %v1713 = vsel %vm1706, %v1691, %v1693
      %v1714 = vsel %vm1706, %v1693, %v1695
      %v1715 = vsel %vm1706, %v1697, %v1699
      %v1716 = vsel %vm1706, %v1699, %v1701
      %v1717 = vsel %vm1706, %v1701, %v1703
      %v1718 = vsel %vm1706, %v1703, %v1705
      %v1731 = vadd.f32 %v1622, %v1707
      %v1732 = vadd.f32 %v1623, %v1708
      %v1733 = vadd.f32 %v1624, %v1709
      %v1734 = vadd.f32 %v1625, %v1710
      %v1735 = vadd.f32 %v1626, %v1711
      %v1736 = vadd.f32 %v1627, %v1712
      %v1737 = vadd.f32 %v1628, %v1713
      %v1738 = vadd.f32 %v1629, %v1714
      %v1739 = vadd.f32 %v1630, %v1715
      %v1740 = vadd.f32 %v1631, %v1716
      %v1741 = vadd.f32 %v1632, %v1717
      %v1742 = vadd.f32 %v1633, %v1718
      %1743 = vset.pattern.permute.xlu0 16
      %1744 = vperm.xlu0 %1743, %v28
      %v1745 = vpop.permute.xlu0 %1744
      %1747 = vset.pattern.permute.xlu0 16
      %1748 = vperm.xlu0 %1747, %v29
      %v1749 = vpop.permute.xlu0 %1748
      %1751 = vset.pattern.permute.xlu0 16
      %1752 = vperm.xlu0 %1751, %v30
      %v1753 = vpop.permute.xlu0 %1752
      %v1755 = vmul.f32 %v1745, %v62
      %v1756 = vmul.f32 %v1745, %v66
      %v1757 = vmul.f32 %v1745, %v70
      %v1758 = vmul.f32 %v1745, %v74
      %v1759 = vmul.f32 %v1745, %v118
      %v1760 = vmul.f32 %v1749, %v62
      %v1761 = vmul.f32 %v1749, %v66
      %v1762 = vmul.f32 %v1749, %v70
      %v1763 = vmul.f32 %v1749, %v74
      %v1764 = vmul.f32 %v1749, %v118
      %v1765 = vmul.f32 %v1753, %v62
      %v1766 = vmul.f32 %v1753, %v66
      %v1767 = vmul.f32 %v1753, %v70
      %v1768 = vmul.f32 %v1753, %v74
      %v1769 = vmul.f32 %v1753, %v118
      %1785 = vrot.lane.b32.xlu0 %v1755, 112
      %v1786 = vpop.permute.xlu0 %1785
      %1787 = vrot.lane.b32.xlu0 %v1756, 112
      %v1788 = vpop.permute.xlu0 %1787
      %1789 = vrot.lane.b32.xlu0 %v1757, 112
      %v1790 = vpop.permute.xlu0 %1789
      %1791 = vrot.lane.b32.xlu0 %v1758, 112
      %v1792 = vpop.permute.xlu0 %1791
      %1793 = vrot.lane.b32.xlu0 %v1759, 112
      %v1794 = vpop.permute.xlu0 %1793
      %1795 = vrot.lane.b32.xlu0 %v1760, 112
      %v1796 = vpop.permute.xlu0 %1795
      %1797 = vrot.lane.b32.xlu0 %v1761, 112
      %v1798 = vpop.permute.xlu0 %1797
      %1799 = vrot.lane.b32.xlu0 %v1762, 112
      %v1800 = vpop.permute.xlu0 %1799
      %1801 = vrot.lane.b32.xlu0 %v1763, 112
      %v1802 = vpop.permute.xlu0 %1801
      %1803 = vrot.lane.b32.xlu0 %v1764, 112
      %v1804 = vpop.permute.xlu0 %1803
      %1805 = vrot.lane.b32.xlu0 %v1765, 112
      %v1806 = vpop.permute.xlu0 %1805
      %1807 = vrot.lane.b32.xlu0 %v1766, 112
      %v1808 = vpop.permute.xlu0 %1807
      %1809 = vrot.lane.b32.xlu0 %v1767, 112
      %v1810 = vpop.permute.xlu0 %1809
      %1811 = vrot.lane.b32.xlu0 %v1768, 112
      %v1812 = vpop.permute.xlu0 %1811
      %1813 = vrot.lane.b32.xlu0 %v1769, 112
      %v1814 = vpop.permute.xlu0 %1813
      %vm1815 = vcmask 916480
      %v1816 = vsel %vm1815, %v1786, %v1788
      %v1817 = vsel %vm1815, %v1788, %v1790
      %v1818 = vsel %vm1815, %v1790, %v1792
      %v1819 = vsel %vm1815, %v1792, %v1794
      %v1820 = vsel %vm1815, %v1796, %v1798
      %v1821 = vsel %vm1815, %v1798, %v1800
      %v1822 = vsel %vm1815, %v1800, %v1802
      %v1823 = vsel %vm1815, %v1802, %v1804
      %v1824 = vsel %vm1815, %v1806, %v1808
      %v1825 = vsel %vm1815, %v1808, %v1810
      %v1826 = vsel %vm1815, %v1810, %v1812
      %v1827 = vsel %vm1815, %v1812, %v1814
      %v1840 = vadd.f32 %v1731, %v1816
      %v1841 = vadd.f32 %v1732, %v1817
      %v1842 = vadd.f32 %v1733, %v1818
      %v1843 = vadd.f32 %v1734, %v1819
      %v1844 = vadd.f32 %v1735, %v1820
      %v1845 = vadd.f32 %v1736, %v1821
      %v1846 = vadd.f32 %v1737, %v1822
      %v1847 = vadd.f32 %v1738, %v1823
      %v1848 = vadd.f32 %v1739, %v1824
      %v1849 = vadd.f32 %v1740, %v1825
      %v1850 = vadd.f32 %v1741, %v1826
      %v1851 = vadd.f32 %v1742, %v1827
      %1852 = vset.pattern.permute.xlu0 17
      %1853 = vperm.xlu0 %1852, %v28
      %v1854 = vpop.permute.xlu0 %1853
      %1856 = vset.pattern.permute.xlu0 17
      %1857 = vperm.xlu0 %1856, %v29
      %v1858 = vpop.permute.xlu0 %1857
      %1860 = vset.pattern.permute.xlu0 17
      %1861 = vperm.xlu0 %1860, %v30
      %v1862 = vpop.permute.xlu0 %1861
      %v1864 = vmul.f32 %v1854, %v62
      %v1865 = vmul.f32 %v1854, %v66
      %v1866 = vmul.f32 %v1854, %v70
      %v1867 = vmul.f32 %v1854, %v74
      %v1868 = vmul.f32 %v1854, %v118
      %v1869 = vmul.f32 %v1858, %v62
      %v1870 = vmul.f32 %v1858, %v66
      %v1871 = vmul.f32 %v1858, %v70
      %v1872 = vmul.f32 %v1858, %v74
      %v1873 = vmul.f32 %v1858, %v118
      %v1874 = vmul.f32 %v1862, %v62
      %v1875 = vmul.f32 %v1862, %v66
      %v1876 = vmul.f32 %v1862, %v70
      %v1877 = vmul.f32 %v1862, %v74
      %v1878 = vmul.f32 %v1862, %v118
      %1894 = vrot.lane.b32.xlu0 %v1864, 111
      %v1895 = vpop.permute.xlu0 %1894
      %1896 = vrot.lane.b32.xlu0 %v1865, 111
      %v1897 = vpop.permute.xlu0 %1896
      %1898 = vrot.lane.b32.xlu0 %v1866, 111
      %v1899 = vpop.permute.xlu0 %1898
      %1900 = vrot.lane.b32.xlu0 %v1867, 111
      %v1901 = vpop.permute.xlu0 %1900
      %1902 = vrot.lane.b32.xlu0 %v1868, 111
      %v1903 = vpop.permute.xlu0 %1902
      %1904 = vrot.lane.b32.xlu0 %v1869, 111
      %v1905 = vpop.permute.xlu0 %1904
      %1906 = vrot.lane.b32.xlu0 %v1870, 111
      %v1907 = vpop.permute.xlu0 %1906
      %1908 = vrot.lane.b32.xlu0 %v1871, 111
      %v1909 = vpop.permute.xlu0 %1908
      %1910 = vrot.lane.b32.xlu0 %v1872, 111
      %v1911 = vpop.permute.xlu0 %1910
      %1912 = vrot.lane.b32.xlu0 %v1873, 111
      %v1913 = vpop.permute.xlu0 %1912
      %1914 = vrot.lane.b32.xlu0 %v1874, 111
      %v1915 = vpop.permute.xlu0 %1914
      %1916 = vrot.lane.b32.xlu0 %v1875, 111
      %v1917 = vpop.permute.xlu0 %1916
      %1918 = vrot.lane.b32.xlu0 %v1876, 111
      %v1919 = vpop.permute.xlu0 %1918
      %1920 = vrot.lane.b32.xlu0 %v1877, 111
      %v1921 = vpop.permute.xlu0 %1920
      %1922 = vrot.lane.b32.xlu0 %v1878, 111
      %v1923 = vpop.permute.xlu0 %1922
      %vm1924 = vcmask 908288
      %v1925 = vsel %vm1924, %v1895, %v1897
      %v1926 = vsel %vm1924, %v1897, %v1899
      %v1927 = vsel %vm1924, %v1899, %v1901
      %v1928 = vsel %vm1924, %v1901, %v1903
      %v1929 = vsel %vm1924, %v1905, %v1907
      %v1930 = vsel %vm1924, %v1907, %v1909
      %v1931 = vsel %vm1924, %v1909, %v1911
      %v1932 = vsel %vm1924, %v1911, %v1913
      %v1933 = vsel %vm1924, %v1915, %v1917
      %v1934 = vsel %vm1924, %v1917, %v1919
      %v1935 = vsel %vm1924, %v1919, %v1921
      %v1936 = vsel %vm1924, %v1921, %v1923
      %v1949 = vadd.f32 %v1840, %v1925
      %v1950 = vadd.f32 %v1841, %v1926
      %v1951 = vadd.f32 %v1842, %v1927
      %v1952 = vadd.f32 %v1843, %v1928
      %v1953 = vadd.f32 %v1844, %v1929
      %v1954 = vadd.f32 %v1845, %v1930
      %v1955 = vadd.f32 %v1846, %v1931
      %v1956 = vadd.f32 %v1847, %v1932
      %v1957 = vadd.f32 %v1848, %v1933
      %v1958 = vadd.f32 %v1849, %v1934
      %v1959 = vadd.f32 %v1850, %v1935
      %v1960 = vadd.f32 %v1851, %v1936
      %1961 = vset.pattern.permute.xlu0 18
      %1962 = vperm.xlu0 %1961, %v28
      %v1963 = vpop.permute.xlu0 %1962
      %1965 = vset.pattern.permute.xlu0 18
      %1966 = vperm.xlu0 %1965, %v29
      %v1967 = vpop.permute.xlu0 %1966
      %1969 = vset.pattern.permute.xlu0 18
      %1970 = vperm.xlu0 %1969, %v30
      %v1971 = vpop.permute.xlu0 %1970
      %v1973 = vmul.f32 %v1963, %v62
      %v1974 = vmul.f32 %v1963, %v66
      %v1975 = vmul.f32 %v1963, %v70
      %v1976 = vmul.f32 %v1963, %v74
      %v1977 = vmul.f32 %v1963, %v118
      %v1978 = vmul.f32 %v1967, %v62
      %v1979 = vmul.f32 %v1967, %v66
      %v1980 = vmul.f32 %v1967, %v70
      %v1981 = vmul.f32 %v1967, %v74
      %v1982 = vmul.f32 %v1967, %v118
      %v1983 = vmul.f32 %v1971, %v62
      %v1984 = vmul.f32 %v1971, %v66
      %v1985 = vmul.f32 %v1971, %v70
      %v1986 = vmul.f32 %v1971, %v74
      %v1987 = vmul.f32 %v1971, %v118
      %2003 = vrot.lane.b32.xlu0 %v1973, 110
      %v2004 = vpop.permute.xlu0 %2003
      %2005 = vrot.lane.b32.xlu0 %v1974, 110
      %v2006 = vpop.permute.xlu0 %2005
      %2007 = vrot.lane.b32.xlu0 %v1975, 110
      %v2008 = vpop.permute.xlu0 %2007
      %2009 = vrot.lane.b32.xlu0 %v1976, 110
      %v2010 = vpop.permute.xlu0 %2009
      %2011 = vrot.lane.b32.xlu0 %v1977, 110
      %v2012 = vpop.permute.xlu0 %2011
      %2013 = vrot.lane.b32.xlu0 %v1978, 110
      %v2014 = vpop.permute.xlu0 %2013
      %2015 = vrot.lane.b32.xlu0 %v1979, 110
      %v2016 = vpop.permute.xlu0 %2015
      %2017 = vrot.lane.b32.xlu0 %v1980, 110
      %v2018 = vpop.permute.xlu0 %2017
      %2019 = vrot.lane.b32.xlu0 %v1981, 110
      %v2020 = vpop.permute.xlu0 %2019
      %2021 = vrot.lane.b32.xlu0 %v1982, 110
      %v2022 = vpop.permute.xlu0 %2021
      %2023 = vrot.lane.b32.xlu0 %v1983, 110
      %v2024 = vpop.permute.xlu0 %2023
      %2025 = vrot.lane.b32.xlu0 %v1984, 110
      %v2026 = vpop.permute.xlu0 %2025
      %2027 = vrot.lane.b32.xlu0 %v1985, 110
      %v2028 = vpop.permute.xlu0 %2027
      %2029 = vrot.lane.b32.xlu0 %v1986, 110
      %v2030 = vpop.permute.xlu0 %2029
      %2031 = vrot.lane.b32.xlu0 %v1987, 110
      %v2032 = vpop.permute.xlu0 %2031
      %vm2033 = vcmask 900096
      %v2034 = vsel %vm2033, %v2004, %v2006
      %v2035 = vsel %vm2033, %v2006, %v2008
      %v2036 = vsel %vm2033, %v2008, %v2010
      %v2037 = vsel %vm2033, %v2010, %v2012
      %v2038 = vsel %vm2033, %v2014, %v2016
      %v2039 = vsel %vm2033, %v2016, %v2018
      %v2040 = vsel %vm2033, %v2018, %v2020
      %v2041 = vsel %vm2033, %v2020, %v2022
      %v2042 = vsel %vm2033, %v2024, %v2026
      %v2043 = vsel %vm2033, %v2026, %v2028
      %v2044 = vsel %vm2033, %v2028, %v2030
      %v2045 = vsel %vm2033, %v2030, %v2032
      %v2058 = vadd.f32 %v1949, %v2034
      %v2059 = vadd.f32 %v1950, %v2035
      %v2060 = vadd.f32 %v1951, %v2036
      %v2061 = vadd.f32 %v1952, %v2037
      %v2062 = vadd.f32 %v1953, %v2038
      %v2063 = vadd.f32 %v1954, %v2039
      %v2064 = vadd.f32 %v1955, %v2040
      %v2065 = vadd.f32 %v1956, %v2041
      %v2066 = vadd.f32 %v1957, %v2042
      %v2067 = vadd.f32 %v1958, %v2043
      %v2068 = vadd.f32 %v1959, %v2044
      %v2069 = vadd.f32 %v1960, %v2045
      %2070 = vset.pattern.permute.xlu0 19
      %2071 = vperm.xlu0 %2070, %v28
      %v2072 = vpop.permute.xlu0 %2071
      %2074 = vset.pattern.permute.xlu0 19
      %2075 = vperm.xlu0 %2074, %v29
      %v2076 = vpop.permute.xlu0 %2075
      %2078 = vset.pattern.permute.xlu0 19
      %2079 = vperm.xlu0 %2078, %v30
      %v2080 = vpop.permute.xlu0 %2079
      %v2082 = vmul.f32 %v2072, %v62
      %v2083 = vmul.f32 %v2072, %v66
      %v2084 = vmul.f32 %v2072, %v70
      %v2085 = vmul.f32 %v2072, %v74
      %v2086 = vmul.f32 %v2072, %v118
      %v2087 = vmul.f32 %v2076, %v62
      %v2088 = vmul.f32 %v2076, %v66
      %v2089 = vmul.f32 %v2076, %v70
      %v2090 = vmul.f32 %v2076, %v74
      %v2091 = vmul.f32 %v2076, %v118
      %v2092 = vmul.f32 %v2080, %v62
      %v2093 = vmul.f32 %v2080, %v66
      %v2094 = vmul.f32 %v2080, %v70
      %v2095 = vmul.f32 %v2080, %v74
      %v2096 = vmul.f32 %v2080, %v118
      %2112 = vrot.lane.b32.xlu0 %v2082, 109
      %v2113 = vpop.permute.xlu0 %2112
      %2114 = vrot.lane.b32.xlu0 %v2083, 109
      %v2115 = vpop.permute.xlu0 %2114
      %2116 = vrot.lane.b32.xlu0 %v2084, 109
      %v2117 = vpop.permute.xlu0 %2116
      %2118 = vrot.lane.b32.xlu0 %v2085, 109
      %v2119 = vpop.permute.xlu0 %2118
      %2120 = vrot.lane.b32.xlu0 %v2086, 109
      %v2121 = vpop.permute.xlu0 %2120
      %2122 = vrot.lane.b32.xlu0 %v2087, 109
      %v2123 = vpop.permute.xlu0 %2122
      %2124 = vrot.lane.b32.xlu0 %v2088, 109
      %v2125 = vpop.permute.xlu0 %2124
      %2126 = vrot.lane.b32.xlu0 %v2089, 109
      %v2127 = vpop.permute.xlu0 %2126
      %2128 = vrot.lane.b32.xlu0 %v2090, 109
      %v2129 = vpop.permute.xlu0 %2128
      %2130 = vrot.lane.b32.xlu0 %v2091, 109
      %v2131 = vpop.permute.xlu0 %2130
      %2132 = vrot.lane.b32.xlu0 %v2092, 109
      %v2133 = vpop.permute.xlu0 %2132
      %2134 = vrot.lane.b32.xlu0 %v2093, 109
      %v2135 = vpop.permute.xlu0 %2134
      %2136 = vrot.lane.b32.xlu0 %v2094, 109
      %v2137 = vpop.permute.xlu0 %2136
      %2138 = vrot.lane.b32.xlu0 %v2095, 109
      %v2139 = vpop.permute.xlu0 %2138
      %2140 = vrot.lane.b32.xlu0 %v2096, 109
      %v2141 = vpop.permute.xlu0 %2140
      %vm2142 = vcmask 891904
      %v2143 = vsel %vm2142, %v2113, %v2115
      %v2144 = vsel %vm2142, %v2115, %v2117
      %v2145 = vsel %vm2142, %v2117, %v2119
      %v2146 = vsel %vm2142, %v2119, %v2121
      %v2147 = vsel %vm2142, %v2123, %v2125
      %v2148 = vsel %vm2142, %v2125, %v2127
      %v2149 = vsel %vm2142, %v2127, %v2129
      %v2150 = vsel %vm2142, %v2129, %v2131
      %v2151 = vsel %vm2142, %v2133, %v2135
      %v2152 = vsel %vm2142, %v2135, %v2137
      %v2153 = vsel %vm2142, %v2137, %v2139
      %v2154 = vsel %vm2142, %v2139, %v2141
      %v2167 = vadd.f32 %v2058, %v2143
      %v2168 = vadd.f32 %v2059, %v2144
      %v2169 = vadd.f32 %v2060, %v2145
      %v2170 = vadd.f32 %v2061, %v2146
      %v2171 = vadd.f32 %v2062, %v2147
      %v2172 = vadd.f32 %v2063, %v2148
      %v2173 = vadd.f32 %v2064, %v2149
      %v2174 = vadd.f32 %v2065, %v2150
      %v2175 = vadd.f32 %v2066, %v2151
      %v2176 = vadd.f32 %v2067, %v2152
      %v2177 = vadd.f32 %v2068, %v2153
      %v2178 = vadd.f32 %v2069, %v2154
      %2179 = vset.pattern.permute.xlu0 20
      %2180 = vperm.xlu0 %2179, %v28
      %v2181 = vpop.permute.xlu0 %2180
      %2183 = vset.pattern.permute.xlu0 20
      %2184 = vperm.xlu0 %2183, %v29
      %v2185 = vpop.permute.xlu0 %2184
      %2187 = vset.pattern.permute.xlu0 20
      %2188 = vperm.xlu0 %2187, %v30
      %v2189 = vpop.permute.xlu0 %2188
      %v2191 = vmul.f32 %v2181, %v62
      %v2192 = vmul.f32 %v2181, %v66
      %v2193 = vmul.f32 %v2181, %v70
      %v2194 = vmul.f32 %v2181, %v74
      %v2195 = vmul.f32 %v2181, %v118
      %v2196 = vmul.f32 %v2185, %v62
      %v2197 = vmul.f32 %v2185, %v66
      %v2198 = vmul.f32 %v2185, %v70
      %v2199 = vmul.f32 %v2185, %v74
      %v2200 = vmul.f32 %v2185, %v118
      %v2201 = vmul.f32 %v2189, %v62
      %v2202 = vmul.f32 %v2189, %v66
      %v2203 = vmul.f32 %v2189, %v70
      %v2204 = vmul.f32 %v2189, %v74
      %v2205 = vmul.f32 %v2189, %v118
      %2221 = vrot.lane.b32.xlu0 %v2191, 108
      %v2222 = vpop.permute.xlu0 %2221
      %2223 = vrot.lane.b32.xlu0 %v2192, 108
      %v2224 = vpop.permute.xlu0 %2223
      %2225 = vrot.lane.b32.xlu0 %v2193, 108
      %v2226 = vpop.permute.xlu0 %2225
      %2227 = vrot.lane.b32.xlu0 %v2194, 108
      %v2228 = vpop.permute.xlu0 %2227
      %2229 = vrot.lane.b32.xlu0 %v2195, 108
      %v2230 = vpop.permute.xlu0 %2229
      %2231 = vrot.lane.b32.xlu0 %v2196, 108
      %v2232 = vpop.permute.xlu0 %2231
      %2233 = vrot.lane.b32.xlu0 %v2197, 108
      %v2234 = vpop.permute.xlu0 %2233
      %2235 = vrot.lane.b32.xlu0 %v2198, 108
      %v2236 = vpop.permute.xlu0 %2235
      %2237 = vrot.lane.b32.xlu0 %v2199, 108
      %v2238 = vpop.permute.xlu0 %2237
      %2239 = vrot.lane.b32.xlu0 %v2200, 108
      %v2240 = vpop.permute.xlu0 %2239
      %2241 = vrot.lane.b32.xlu0 %v2201, 108
      %v2242 = vpop.permute.xlu0 %2241
      %2243 = vrot.lane.b32.xlu0 %v2202, 108
      %v2244 = vpop.permute.xlu0 %2243
      %2245 = vrot.lane.b32.xlu0 %v2203, 108
      %v2246 = vpop.permute.xlu0 %2245
      %2247 = vrot.lane.b32.xlu0 %v2204, 108
      %v2248 = vpop.permute.xlu0 %2247
      %2249 = vrot.lane.b32.xlu0 %v2205, 108
      %v2250 = vpop.permute.xlu0 %2249
      %vm2251 = vcmask 883712
      %v2252 = vsel %vm2251, %v2222, %v2224
      %v2253 = vsel %vm2251, %v2224, %v2226
      %v2254 = vsel %vm2251, %v2226, %v2228
      %v2255 = vsel %vm2251, %v2228, %v2230
      %v2256 = vsel %vm2251, %v2232, %v2234
      %v2257 = vsel %vm2251, %v2234, %v2236
      %v2258 = vsel %vm2251, %v2236, %v2238
      %v2259 = vsel %vm2251, %v2238, %v2240
      %v2260 = vsel %vm2251, %v2242, %v2244
      %v2261 = vsel %vm2251, %v2244, %v2246
      %v2262 = vsel %vm2251, %v2246, %v2248
      %v2263 = vsel %vm2251, %v2248, %v2250
      %v2276 = vadd.f32 %v2167, %v2252
      %v2277 = vadd.f32 %v2168, %v2253
      %v2278 = vadd.f32 %v2169, %v2254
      %v2279 = vadd.f32 %v2170, %v2255
      %v2280 = vadd.f32 %v2171, %v2256
      %v2281 = vadd.f32 %v2172, %v2257
      %v2282 = vadd.f32 %v2173, %v2258
      %v2283 = vadd.f32 %v2174, %v2259
      %v2284 = vadd.f32 %v2175, %v2260
      %v2285 = vadd.f32 %v2176, %v2261
      %v2286 = vadd.f32 %v2177, %v2262
      %v2287 = vadd.f32 %v2178, %v2263
      %2288 = vset.pattern.permute.xlu0 21
      %2289 = vperm.xlu0 %2288, %v28
      %v2290 = vpop.permute.xlu0 %2289
      %2292 = vset.pattern.permute.xlu0 21
      %2293 = vperm.xlu0 %2292, %v29
      %v2294 = vpop.permute.xlu0 %2293
      %2296 = vset.pattern.permute.xlu0 21
      %2297 = vperm.xlu0 %2296, %v30
      %v2298 = vpop.permute.xlu0 %2297
      %v2300 = vmul.f32 %v2290, %v62
      %v2301 = vmul.f32 %v2290, %v66
      %v2302 = vmul.f32 %v2290, %v70
      %v2303 = vmul.f32 %v2290, %v74
      %v2304 = vmul.f32 %v2290, %v118
      %v2305 = vmul.f32 %v2294, %v62
      %v2306 = vmul.f32 %v2294, %v66
      %v2307 = vmul.f32 %v2294, %v70
      %v2308 = vmul.f32 %v2294, %v74
      %v2309 = vmul.f32 %v2294, %v118
      %v2310 = vmul.f32 %v2298, %v62
      %v2311 = vmul.f32 %v2298, %v66
      %v2312 = vmul.f32 %v2298, %v70
      %v2313 = vmul.f32 %v2298, %v74
      %v2314 = vmul.f32 %v2298, %v118
      %2330 = vrot.lane.b32.xlu0 %v2300, 107
      %v2331 = vpop.permute.xlu0 %2330
      %2332 = vrot.lane.b32.xlu0 %v2301, 107
      %v2333 = vpop.permute.xlu0 %2332
      %2334 = vrot.lane.b32.xlu0 %v2302, 107
      %v2335 = vpop.permute.xlu0 %2334
      %2336 = vrot.lane.b32.xlu0 %v2303, 107
      %v2337 = vpop.permute.xlu0 %2336
      %2338 = vrot.lane.b32.xlu0 %v2304, 107
      %v2339 = vpop.permute.xlu0 %2338
      %2340 = vrot.lane.b32.xlu0 %v2305, 107
      %v2341 = vpop.permute.xlu0 %2340
      %2342 = vrot.lane.b32.xlu0 %v2306, 107
      %v2343 = vpop.permute.xlu0 %2342
      %2344 = vrot.lane.b32.xlu0 %v2307, 107
      %v2345 = vpop.permute.xlu0 %2344
      %2346 = vrot.lane.b32.xlu0 %v2308, 107
      %v2347 = vpop.permute.xlu0 %2346
      %2348 = vrot.lane.b32.xlu0 %v2309, 107
      %v2349 = vpop.permute.xlu0 %2348
      %2350 = vrot.lane.b32.xlu0 %v2310, 107
      %v2351 = vpop.permute.xlu0 %2350
      %2352 = vrot.lane.b32.xlu0 %v2311, 107
      %v2353 = vpop.permute.xlu0 %2352
      %2354 = vrot.lane.b32.xlu0 %v2312, 107
      %v2355 = vpop.permute.xlu0 %2354
      %2356 = vrot.lane.b32.xlu0 %v2313, 107
      %v2357 = vpop.permute.xlu0 %2356
      %2358 = vrot.lane.b32.xlu0 %v2314, 107
      %v2359 = vpop.permute.xlu0 %2358
      %vm2360 = vcmask 875520
      %v2361 = vsel %vm2360, %v2331, %v2333
      %v2362 = vsel %vm2360, %v2333, %v2335
      %v2363 = vsel %vm2360, %v2335, %v2337
      %v2364 = vsel %vm2360, %v2337, %v2339
      %v2365 = vsel %vm2360, %v2341, %v2343
      %v2366 = vsel %vm2360, %v2343, %v2345
      %v2367 = vsel %vm2360, %v2345, %v2347
      %v2368 = vsel %vm2360, %v2347, %v2349
      %v2369 = vsel %vm2360, %v2351, %v2353
      %v2370 = vsel %vm2360, %v2353, %v2355
      %v2371 = vsel %vm2360, %v2355, %v2357
      %v2372 = vsel %vm2360, %v2357, %v2359
      %v2385 = vadd.f32 %v2276, %v2361
      %v2386 = vadd.f32 %v2277, %v2362
      %v2387 = vadd.f32 %v2278, %v2363
      %v2388 = vadd.f32 %v2279, %v2364
      %v2389 = vadd.f32 %v2280, %v2365
      %v2390 = vadd.f32 %v2281, %v2366
      %v2391 = vadd.f32 %v2282, %v2367
      %v2392 = vadd.f32 %v2283, %v2368
      %v2393 = vadd.f32 %v2284, %v2369
      %v2394 = vadd.f32 %v2285, %v2370
      %v2395 = vadd.f32 %v2286, %v2371
      %v2396 = vadd.f32 %v2287, %v2372
      %2397 = vset.pattern.permute.xlu0 22
      %2398 = vperm.xlu0 %2397, %v28
      %v2399 = vpop.permute.xlu0 %2398
      %2401 = vset.pattern.permute.xlu0 22
      %2402 = vperm.xlu0 %2401, %v29
      %v2403 = vpop.permute.xlu0 %2402
      %2405 = vset.pattern.permute.xlu0 22
      %2406 = vperm.xlu0 %2405, %v30
      %v2407 = vpop.permute.xlu0 %2406
      %v2409 = vmul.f32 %v2399, %v62
      %v2410 = vmul.f32 %v2399, %v66
      %v2411 = vmul.f32 %v2399, %v70
      %v2412 = vmul.f32 %v2399, %v74
      %v2413 = vmul.f32 %v2399, %v118
      %v2414 = vmul.f32 %v2403, %v62
      %v2415 = vmul.f32 %v2403, %v66
      %v2416 = vmul.f32 %v2403, %v70
      %v2417 = vmul.f32 %v2403, %v74
      %v2418 = vmul.f32 %v2403, %v118
      %v2419 = vmul.f32 %v2407, %v62
      %v2420 = vmul.f32 %v2407, %v66
      %v2421 = vmul.f32 %v2407, %v70
      %v2422 = vmul.f32 %v2407, %v74
      %v2423 = vmul.f32 %v2407, %v118
      %2439 = vrot.lane.b32.xlu0 %v2409, 106
      %v2440 = vpop.permute.xlu0 %2439
      %2441 = vrot.lane.b32.xlu0 %v2410, 106
      %v2442 = vpop.permute.xlu0 %2441
      %2443 = vrot.lane.b32.xlu0 %v2411, 106
      %v2444 = vpop.permute.xlu0 %2443
      %2445 = vrot.lane.b32.xlu0 %v2412, 106
      %v2446 = vpop.permute.xlu0 %2445
      %2447 = vrot.lane.b32.xlu0 %v2413, 106
      %v2448 = vpop.permute.xlu0 %2447
      %2449 = vrot.lane.b32.xlu0 %v2414, 106
      %v2450 = vpop.permute.xlu0 %2449
      %2451 = vrot.lane.b32.xlu0 %v2415, 106
      %v2452 = vpop.permute.xlu0 %2451
      %2453 = vrot.lane.b32.xlu0 %v2416, 106
      %v2454 = vpop.permute.xlu0 %2453
      %2455 = vrot.lane.b32.xlu0 %v2417, 106
      %v2456 = vpop.permute.xlu0 %2455
      %2457 = vrot.lane.b32.xlu0 %v2418, 106
      %v2458 = vpop.permute.xlu0 %2457
      %2459 = vrot.lane.b32.xlu0 %v2419, 106
      %v2460 = vpop.permute.xlu0 %2459
      %2461 = vrot.lane.b32.xlu0 %v2420, 106
      %v2462 = vpop.permute.xlu0 %2461
      %2463 = vrot.lane.b32.xlu0 %v2421, 106
      %v2464 = vpop.permute.xlu0 %2463
      %2465 = vrot.lane.b32.xlu0 %v2422, 106
      %v2466 = vpop.permute.xlu0 %2465
      %2467 = vrot.lane.b32.xlu0 %v2423, 106
      %v2468 = vpop.permute.xlu0 %2467
      %vm2469 = vcmask 867328
      %v2470 = vsel %vm2469, %v2440, %v2442
      %v2471 = vsel %vm2469, %v2442, %v2444
      %v2472 = vsel %vm2469, %v2444, %v2446
      %v2473 = vsel %vm2469, %v2446, %v2448
      %v2474 = vsel %vm2469, %v2450, %v2452
      %v2475 = vsel %vm2469, %v2452, %v2454
      %v2476 = vsel %vm2469, %v2454, %v2456
      %v2477 = vsel %vm2469, %v2456, %v2458
      %v2478 = vsel %vm2469, %v2460, %v2462
      %v2479 = vsel %vm2469, %v2462, %v2464
      %v2480 = vsel %vm2469, %v2464, %v2466
      %v2481 = vsel %vm2469, %v2466, %v2468
      %v2494 = vadd.f32 %v2385, %v2470
      %v2495 = vadd.f32 %v2386, %v2471
      %v2496 = vadd.f32 %v2387, %v2472
      %v2497 = vadd.f32 %v2388, %v2473
      %v2498 = vadd.f32 %v2389, %v2474
      %v2499 = vadd.f32 %v2390, %v2475
      %v2500 = vadd.f32 %v2391, %v2476
      %v2501 = vadd.f32 %v2392, %v2477
      %v2502 = vadd.f32 %v2393, %v2478
      %v2503 = vadd.f32 %v2394, %v2479
      %v2504 = vadd.f32 %v2395, %v2480
      %v2505 = vadd.f32 %v2396, %v2481
      %2506 = vset.pattern.permute.xlu0 23
      %2507 = vperm.xlu0 %2506, %v28
      %v2508 = vpop.permute.xlu0 %2507
      %2510 = vset.pattern.permute.xlu0 23
      %2511 = vperm.xlu0 %2510, %v29
      %v2512 = vpop.permute.xlu0 %2511
      %2514 = vset.pattern.permute.xlu0 23
      %2515 = vperm.xlu0 %2514, %v30
      %v2516 = vpop.permute.xlu0 %2515
      %v2518 = vmul.f32 %v2508, %v62
      %v2519 = vmul.f32 %v2508, %v66
      %v2520 = vmul.f32 %v2508, %v70
      %v2521 = vmul.f32 %v2508, %v74
      %v2522 = vmul.f32 %v2508, %v118
      %v2523 = vmul.f32 %v2512, %v62
      %v2524 = vmul.f32 %v2512, %v66
      %v2525 = vmul.f32 %v2512, %v70
      %v2526 = vmul.f32 %v2512, %v74
      %v2527 = vmul.f32 %v2512, %v118
      %v2528 = vmul.f32 %v2516, %v62
      %v2529 = vmul.f32 %v2516, %v66
      %v2530 = vmul.f32 %v2516, %v70
      %v2531 = vmul.f32 %v2516, %v74
      %v2532 = vmul.f32 %v2516, %v118
      %2548 = vrot.lane.b32.xlu0 %v2518, 105
      %v2549 = vpop.permute.xlu0 %2548
      %2550 = vrot.lane.b32.xlu0 %v2519, 105
      %v2551 = vpop.permute.xlu0 %2550
      %2552 = vrot.lane.b32.xlu0 %v2520, 105
      %v2553 = vpop.permute.xlu0 %2552
      %2554 = vrot.lane.b32.xlu0 %v2521, 105
      %v2555 = vpop.permute.xlu0 %2554
      %2556 = vrot.lane.b32.xlu0 %v2522, 105
      %v2557 = vpop.permute.xlu0 %2556
      %2558 = vrot.lane.b32.xlu0 %v2523, 105
      %v2559 = vpop.permute.xlu0 %2558
      %2560 = vrot.lane.b32.xlu0 %v2524, 105
      %v2561 = vpop.permute.xlu0 %2560
      %2562 = vrot.lane.b32.xlu0 %v2525, 105
      %v2563 = vpop.permute.xlu0 %2562
      %2564 = vrot.lane.b32.xlu0 %v2526, 105
      %v2565 = vpop.permute.xlu0 %2564
      %2566 = vrot.lane.b32.xlu0 %v2527, 105
      %v2567 = vpop.permute.xlu0 %2566
      %2568 = vrot.lane.b32.xlu0 %v2528, 105
      %v2569 = vpop.permute.xlu0 %2568
      %2570 = vrot.lane.b32.xlu0 %v2529, 105
      %v2571 = vpop.permute.xlu0 %2570
      %2572 = vrot.lane.b32.xlu0 %v2530, 105
      %v2573 = vpop.permute.xlu0 %2572
      %2574 = vrot.lane.b32.xlu0 %v2531, 105
      %v2575 = vpop.permute.xlu0 %2574
      %2576 = vrot.lane.b32.xlu0 %v2532, 105
      %v2577 = vpop.permute.xlu0 %2576
      %vm2578 = vcmask 859136
      %v2579 = vsel %vm2578, %v2549, %v2551
      %v2580 = vsel %vm2578, %v2551, %v2553
      %v2581 = vsel %vm2578, %v2553, %v2555
      %v2582 = vsel %vm2578, %v2555, %v2557
      %v2583 = vsel %vm2578, %v2559, %v2561
      %v2584 = vsel %vm2578, %v2561, %v2563
      %v2585 = vsel %vm2578, %v2563, %v2565
      %v2586 = vsel %vm2578, %v2565, %v2567
      %v2587 = vsel %vm2578, %v2569, %v2571
      %v2588 = vsel %vm2578, %v2571, %v2573
      %v2589 = vsel %vm2578, %v2573, %v2575
      %v2590 = vsel %vm2578, %v2575, %v2577
      %v2603 = vadd.f32 %v2494, %v2579
      %v2604 = vadd.f32 %v2495, %v2580
      %v2605 = vadd.f32 %v2496, %v2581
      %v2606 = vadd.f32 %v2497, %v2582
      %v2607 = vadd.f32 %v2498, %v2583
      %v2608 = vadd.f32 %v2499, %v2584
      %v2609 = vadd.f32 %v2500, %v2585
      %v2610 = vadd.f32 %v2501, %v2586
      %v2611 = vadd.f32 %v2502, %v2587
      %v2612 = vadd.f32 %v2503, %v2588
      %v2613 = vadd.f32 %v2504, %v2589
      %v2614 = vadd.f32 %v2505, %v2590
      %2615 = vset.pattern.permute.xlu0 24
      %2616 = vperm.xlu0 %2615, %v28
      %v2617 = vpop.permute.xlu0 %2616
      %2619 = vset.pattern.permute.xlu0 24
      %2620 = vperm.xlu0 %2619, %v29
      %v2621 = vpop.permute.xlu0 %2620
      %2623 = vset.pattern.permute.xlu0 24
      %2624 = vperm.xlu0 %2623, %v30
      %v2625 = vpop.permute.xlu0 %2624
      %v2627 = vmul.f32 %v2617, %v62
      %v2628 = vmul.f32 %v2617, %v66
      %v2629 = vmul.f32 %v2617, %v70
      %v2630 = vmul.f32 %v2617, %v74
      %v2631 = vmul.f32 %v2617, %v118
      %v2632 = vmul.f32 %v2621, %v62
      %v2633 = vmul.f32 %v2621, %v66
      %v2634 = vmul.f32 %v2621, %v70
      %v2635 = vmul.f32 %v2621, %v74
      %v2636 = vmul.f32 %v2621, %v118
      %v2637 = vmul.f32 %v2625, %v62
      %v2638 = vmul.f32 %v2625, %v66
      %v2639 = vmul.f32 %v2625, %v70
      %v2640 = vmul.f32 %v2625, %v74
      %v2641 = vmul.f32 %v2625, %v118
      %2657 = vrot.lane.b32.xlu0 %v2627, 104
      %v2658 = vpop.permute.xlu0 %2657
      %2659 = vrot.lane.b32.xlu0 %v2628, 104
      %v2660 = vpop.permute.xlu0 %2659
      %2661 = vrot.lane.b32.xlu0 %v2629, 104
      %v2662 = vpop.permute.xlu0 %2661
      %2663 = vrot.lane.b32.xlu0 %v2630, 104
      %v2664 = vpop.permute.xlu0 %2663
      %2665 = vrot.lane.b32.xlu0 %v2631, 104
      %v2666 = vpop.permute.xlu0 %2665
      %2667 = vrot.lane.b32.xlu0 %v2632, 104
      %v2668 = vpop.permute.xlu0 %2667
      %2669 = vrot.lane.b32.xlu0 %v2633, 104
      %v2670 = vpop.permute.xlu0 %2669
      %2671 = vrot.lane.b32.xlu0 %v2634, 104
      %v2672 = vpop.permute.xlu0 %2671
      %2673 = vrot.lane.b32.xlu0 %v2635, 104
      %v2674 = vpop.permute.xlu0 %2673
      %2675 = vrot.lane.b32.xlu0 %v2636, 104
      %v2676 = vpop.permute.xlu0 %2675
      %2677 = vrot.lane.b32.xlu0 %v2637, 104
      %v2678 = vpop.permute.xlu0 %2677
      %2679 = vrot.lane.b32.xlu0 %v2638, 104
      %v2680 = vpop.permute.xlu0 %2679
      %2681 = vrot.lane.b32.xlu0 %v2639, 104
      %v2682 = vpop.permute.xlu0 %2681
      %2683 = vrot.lane.b32.xlu0 %v2640, 104
      %v2684 = vpop.permute.xlu0 %2683
      %2685 = vrot.lane.b32.xlu0 %v2641, 104
      %v2686 = vpop.permute.xlu0 %2685
      %vm2687 = vcmask 850944
      %v2688 = vsel %vm2687, %v2658, %v2660
      %v2689 = vsel %vm2687, %v2660, %v2662
      %v2690 = vsel %vm2687, %v2662, %v2664
      %v2691 = vsel %vm2687, %v2664, %v2666
      %v2692 = vsel %vm2687, %v2668, %v2670
      %v2693 = vsel %vm2687, %v2670, %v2672
      %v2694 = vsel %vm2687, %v2672, %v2674
      %v2695 = vsel %vm2687, %v2674, %v2676
      %v2696 = vsel %vm2687, %v2678, %v2680
      %v2697 = vsel %vm2687, %v2680, %v2682
      %v2698 = vsel %vm2687, %v2682, %v2684
      %v2699 = vsel %vm2687, %v2684, %v2686
      %v2712 = vadd.f32 %v2603, %v2688
      %v2713 = vadd.f32 %v2604, %v2689
      %v2714 = vadd.f32 %v2605, %v2690
      %v2715 = vadd.f32 %v2606, %v2691
      %v2716 = vadd.f32 %v2607, %v2692
      %v2717 = vadd.f32 %v2608, %v2693
      %v2718 = vadd.f32 %v2609, %v2694
      %v2719 = vadd.f32 %v2610, %v2695
      %v2720 = vadd.f32 %v2611, %v2696
      %v2721 = vadd.f32 %v2612, %v2697
      %v2722 = vadd.f32 %v2613, %v2698
      %v2723 = vadd.f32 %v2614, %v2699
      %2724 = vset.pattern.permute.xlu0 25
      %2725 = vperm.xlu0 %2724, %v28
      %v2726 = vpop.permute.xlu0 %2725
      %2728 = vset.pattern.permute.xlu0 25
      %2729 = vperm.xlu0 %2728, %v29
      %v2730 = vpop.permute.xlu0 %2729
      %2732 = vset.pattern.permute.xlu0 25
      %2733 = vperm.xlu0 %2732, %v30
      %v2734 = vpop.permute.xlu0 %2733
      %v2736 = vmul.f32 %v2726, %v62
      %v2737 = vmul.f32 %v2726, %v66
      %v2738 = vmul.f32 %v2726, %v70
      %v2739 = vmul.f32 %v2726, %v74
      %v2740 = vmul.f32 %v2726, %v118
      %v2741 = vmul.f32 %v2730, %v62
      %v2742 = vmul.f32 %v2730, %v66
      %v2743 = vmul.f32 %v2730, %v70
      %v2744 = vmul.f32 %v2730, %v74
      %v2745 = vmul.f32 %v2730, %v118
      %v2746 = vmul.f32 %v2734, %v62
      %v2747 = vmul.f32 %v2734, %v66
      %v2748 = vmul.f32 %v2734, %v70
      %v2749 = vmul.f32 %v2734, %v74
      %v2750 = vmul.f32 %v2734, %v118
      %2766 = vrot.lane.b32.xlu0 %v2736, 103
      %v2767 = vpop.permute.xlu0 %2766
      %2768 = vrot.lane.b32.xlu0 %v2737, 103
      %v2769 = vpop.permute.xlu0 %2768
      %2770 = vrot.lane.b32.xlu0 %v2738, 103
      %v2771 = vpop.permute.xlu0 %2770
      %2772 = vrot.lane.b32.xlu0 %v2739, 103
      %v2773 = vpop.permute.xlu0 %2772
      %2774 = vrot.lane.b32.xlu0 %v2740, 103
      %v2775 = vpop.permute.xlu0 %2774
      %2776 = vrot.lane.b32.xlu0 %v2741, 103
      %v2777 = vpop.permute.xlu0 %2776
      %2778 = vrot.lane.b32.xlu0 %v2742, 103
      %v2779 = vpop.permute.xlu0 %2778
      %2780 = vrot.lane.b32.xlu0 %v2743, 103
      %v2781 = vpop.permute.xlu0 %2780
      %2782 = vrot.lane.b32.xlu0 %v2744, 103
      %v2783 = vpop.permute.xlu0 %2782
      %2784 = vrot.lane.b32.xlu0 %v2745, 103
      %v2785 = vpop.permute.xlu0 %2784
      %2786 = vrot.lane.b32.xlu0 %v2746, 103
      %v2787 = vpop.permute.xlu0 %2786
      %2788 = vrot.lane.b32.xlu0 %v2747, 103
      %v2789 = vpop.permute.xlu0 %2788
      %2790 = vrot.lane.b32.xlu0 %v2748, 103
      %v2791 = vpop.permute.xlu0 %2790
      %2792 = vrot.lane.b32.xlu0 %v2749, 103
      %v2793 = vpop.permute.xlu0 %2792
      %2794 = vrot.lane.b32.xlu0 %v2750, 103
      %v2795 = vpop.permute.xlu0 %2794
      %vm2796 = vcmask 842752
      %v2797 = vsel %vm2796, %v2767, %v2769
      %v2798 = vsel %vm2796, %v2769, %v2771
      %v2799 = vsel %vm2796, %v2771, %v2773
      %v2800 = vsel %vm2796, %v2773, %v2775
      %v2801 = vsel %vm2796, %v2777, %v2779
      %v2802 = vsel %vm2796, %v2779, %v2781
      %v2803 = vsel %vm2796, %v2781, %v2783
      %v2804 = vsel %vm2796, %v2783, %v2785
      %v2805 = vsel %vm2796, %v2787, %v2789
      %v2806 = vsel %vm2796, %v2789, %v2791
      %v2807 = vsel %vm2796, %v2791, %v2793
      %v2808 = vsel %vm2796, %v2793, %v2795
      %v2821 = vadd.f32 %v2712, %v2797
      %v2822 = vadd.f32 %v2713, %v2798
      %v2823 = vadd.f32 %v2714, %v2799
      %v2824 = vadd.f32 %v2715, %v2800
      %v2825 = vadd.f32 %v2716, %v2801
      %v2826 = vadd.f32 %v2717, %v2802
      %v2827 = vadd.f32 %v2718, %v2803
      %v2828 = vadd.f32 %v2719, %v2804
      %v2829 = vadd.f32 %v2720, %v2805
      %v2830 = vadd.f32 %v2721, %v2806
      %v2831 = vadd.f32 %v2722, %v2807
      %v2832 = vadd.f32 %v2723, %v2808
      %2833 = vset.pattern.permute.xlu0 26
      %2834 = vperm.xlu0 %2833, %v28
      %v2835 = vpop.permute.xlu0 %2834
      %2837 = vset.pattern.permute.xlu0 26
      %2838 = vperm.xlu0 %2837, %v29
      %v2839 = vpop.permute.xlu0 %2838
      %2841 = vset.pattern.permute.xlu0 26
      %2842 = vperm.xlu0 %2841, %v30
      %v2843 = vpop.permute.xlu0 %2842
      %v2845 = vmul.f32 %v2835, %v62
      %v2846 = vmul.f32 %v2835, %v66
      %v2847 = vmul.f32 %v2835, %v70
      %v2848 = vmul.f32 %v2835, %v74
      %v2849 = vmul.f32 %v2835, %v118
      %v2850 = vmul.f32 %v2839, %v62
      %v2851 = vmul.f32 %v2839, %v66
      %v2852 = vmul.f32 %v2839, %v70
      %v2853 = vmul.f32 %v2839, %v74
      %v2854 = vmul.f32 %v2839, %v118
      %v2855 = vmul.f32 %v2843, %v62
      %v2856 = vmul.f32 %v2843, %v66
      %v2857 = vmul.f32 %v2843, %v70
      %v2858 = vmul.f32 %v2843, %v74
      %v2859 = vmul.f32 %v2843, %v118
      %2875 = vrot.lane.b32.xlu0 %v2845, 102
      %v2876 = vpop.permute.xlu0 %2875
      %2877 = vrot.lane.b32.xlu0 %v2846, 102
      %v2878 = vpop.permute.xlu0 %2877
      %2879 = vrot.lane.b32.xlu0 %v2847, 102
      %v2880 = vpop.permute.xlu0 %2879
      %2881 = vrot.lane.b32.xlu0 %v2848, 102
      %v2882 = vpop.permute.xlu0 %2881
      %2883 = vrot.lane.b32.xlu0 %v2849, 102
      %v2884 = vpop.permute.xlu0 %2883
      %2885 = vrot.lane.b32.xlu0 %v2850, 102
      %v2886 = vpop.permute.xlu0 %2885
      %2887 = vrot.lane.b32.xlu0 %v2851, 102
      %v2888 = vpop.permute.xlu0 %2887
      %2889 = vrot.lane.b32.xlu0 %v2852, 102
      %v2890 = vpop.permute.xlu0 %2889
      %2891 = vrot.lane.b32.xlu0 %v2853, 102
      %v2892 = vpop.permute.xlu0 %2891
      %2893 = vrot.lane.b32.xlu0 %v2854, 102
      %v2894 = vpop.permute.xlu0 %2893
      %2895 = vrot.lane.b32.xlu0 %v2855, 102
      %v2896 = vpop.permute.xlu0 %2895
      %2897 = vrot.lane.b32.xlu0 %v2856, 102
      %v2898 = vpop.permute.xlu0 %2897
      %2899 = vrot.lane.b32.xlu0 %v2857, 102
      %v2900 = vpop.permute.xlu0 %2899
      %2901 = vrot.lane.b32.xlu0 %v2858, 102
      %v2902 = vpop.permute.xlu0 %2901
      %2903 = vrot.lane.b32.xlu0 %v2859, 102
      %v2904 = vpop.permute.xlu0 %2903
      %vm2905 = vcmask 834560
      %v2906 = vsel %vm2905, %v2876, %v2878
      %v2907 = vsel %vm2905, %v2878, %v2880
      %v2908 = vsel %vm2905, %v2880, %v2882
      %v2909 = vsel %vm2905, %v2882, %v2884
      %v2910 = vsel %vm2905, %v2886, %v2888
      %v2911 = vsel %vm2905, %v2888, %v2890
      %v2912 = vsel %vm2905, %v2890, %v2892
      %v2913 = vsel %vm2905, %v2892, %v2894
      %v2914 = vsel %vm2905, %v2896, %v2898
      %v2915 = vsel %vm2905, %v2898, %v2900
      %v2916 = vsel %vm2905, %v2900, %v2902
      %v2917 = vsel %vm2905, %v2902, %v2904
      %v2930 = vadd.f32 %v2821, %v2906
      %v2931 = vadd.f32 %v2822, %v2907
      %v2932 = vadd.f32 %v2823, %v2908
      %v2933 = vadd.f32 %v2824, %v2909
      %v2934 = vadd.f32 %v2825, %v2910
      %v2935 = vadd.f32 %v2826, %v2911
      %v2936 = vadd.f32 %v2827, %v2912
      %v2937 = vadd.f32 %v2828, %v2913
      %v2938 = vadd.f32 %v2829, %v2914
      %v2939 = vadd.f32 %v2830, %v2915
      %v2940 = vadd.f32 %v2831, %v2916
      %v2941 = vadd.f32 %v2832, %v2917
      %2942 = vset.pattern.permute.xlu0 27
      %2943 = vperm.xlu0 %2942, %v28
      %v2944 = vpop.permute.xlu0 %2943
      %2946 = vset.pattern.permute.xlu0 27
      %2947 = vperm.xlu0 %2946, %v29
      %v2948 = vpop.permute.xlu0 %2947
      %2950 = vset.pattern.permute.xlu0 27
      %2951 = vperm.xlu0 %2950, %v30
      %v2952 = vpop.permute.xlu0 %2951
      %v2954 = vmul.f32 %v2944, %v62
      %v2955 = vmul.f32 %v2944, %v66
      %v2956 = vmul.f32 %v2944, %v70
      %v2957 = vmul.f32 %v2944, %v74
      %v2958 = vmul.f32 %v2944, %v118
      %v2959 = vmul.f32 %v2948, %v62
      %v2960 = vmul.f32 %v2948, %v66
      %v2961 = vmul.f32 %v2948, %v70
      %v2962 = vmul.f32 %v2948, %v74
      %v2963 = vmul.f32 %v2948, %v118
      %v2964 = vmul.f32 %v2952, %v62
      %v2965 = vmul.f32 %v2952, %v66
      %v2966 = vmul.f32 %v2952, %v70
      %v2967 = vmul.f32 %v2952, %v74
      %v2968 = vmul.f32 %v2952, %v118
      %2984 = vrot.lane.b32.xlu0 %v2954, 101
      %v2985 = vpop.permute.xlu0 %2984
      %2986 = vrot.lane.b32.xlu0 %v2955, 101
      %v2987 = vpop.permute.xlu0 %2986
      %2988 = vrot.lane.b32.xlu0 %v2956, 101
      %v2989 = vpop.permute.xlu0 %2988
      %2990 = vrot.lane.b32.xlu0 %v2957, 101
      %v2991 = vpop.permute.xlu0 %2990
      %2992 = vrot.lane.b32.xlu0 %v2958, 101
      %v2993 = vpop.permute.xlu0 %2992
      %2994 = vrot.lane.b32.xlu0 %v2959, 101
      %v2995 = vpop.permute.xlu0 %2994
      %2996 = vrot.lane.b32.xlu0 %v2960, 101
      %v2997 = vpop.permute.xlu0 %2996
      %2998 = vrot.lane.b32.xlu0 %v2961, 101
      %v2999 = vpop.permute.xlu0 %2998
      %3000 = vrot.lane.b32.xlu0 %v2962, 101
      %v3001 = vpop.permute.xlu0 %3000
      %3002 = vrot.lane.b32.xlu0 %v2963, 101
      %v3003 = vpop.permute.xlu0 %3002
      %3004 = vrot.lane.b32.xlu0 %v2964, 101
      %v3005 = vpop.permute.xlu0 %3004
      %3006 = vrot.lane.b32.xlu0 %v2965, 101
      %v3007 = vpop.permute.xlu0 %3006
      %3008 = vrot.lane.b32.xlu0 %v2966, 101
      %v3009 = vpop.permute.xlu0 %3008
      %3010 = vrot.lane.b32.xlu0 %v2967, 101
      %v3011 = vpop.permute.xlu0 %3010
      %3012 = vrot.lane.b32.xlu0 %v2968, 101
      %v3013 = vpop.permute.xlu0 %3012
      %vm3014 = vcmask 826368
      %v3015 = vsel %vm3014, %v2985, %v2987
      %v3016 = vsel %vm3014, %v2987, %v2989
      %v3017 = vsel %vm3014, %v2989, %v2991
      %v3018 = vsel %vm3014, %v2991, %v2993
      %v3019 = vsel %vm3014, %v2995, %v2997
      %v3020 = vsel %vm3014, %v2997, %v2999
      %v3021 = vsel %vm3014, %v2999, %v3001
      %v3022 = vsel %vm3014, %v3001, %v3003
      %v3023 = vsel %vm3014, %v3005, %v3007
      %v3024 = vsel %vm3014, %v3007, %v3009
      %v3025 = vsel %vm3014, %v3009, %v3011
      %v3026 = vsel %vm3014, %v3011, %v3013
      %v3039 = vadd.f32 %v2930, %v3015
      %v3040 = vadd.f32 %v2931, %v3016
      %v3041 = vadd.f32 %v2932, %v3017
      %v3042 = vadd.f32 %v2933, %v3018
      %v3043 = vadd.f32 %v2934, %v3019
      %v3044 = vadd.f32 %v2935, %v3020
      %v3045 = vadd.f32 %v2936, %v3021
      %v3046 = vadd.f32 %v2937, %v3022
      %v3047 = vadd.f32 %v2938, %v3023
      %v3048 = vadd.f32 %v2939, %v3024
      %v3049 = vadd.f32 %v2940, %v3025
      %v3050 = vadd.f32 %v2941, %v3026
      %3051 = vset.pattern.permute.xlu0 28
      %3052 = vperm.xlu0 %3051, %v28
      %v3053 = vpop.permute.xlu0 %3052
      %3055 = vset.pattern.permute.xlu0 28
      %3056 = vperm.xlu0 %3055, %v29
      %v3057 = vpop.permute.xlu0 %3056
      %3059 = vset.pattern.permute.xlu0 28
      %3060 = vperm.xlu0 %3059, %v30
      %v3061 = vpop.permute.xlu0 %3060
      %v3063 = vmul.f32 %v3053, %v62
      %v3064 = vmul.f32 %v3053, %v66
      %v3065 = vmul.f32 %v3053, %v70
      %v3066 = vmul.f32 %v3053, %v74
      %v3067 = vmul.f32 %v3053, %v118
      %v3068 = vmul.f32 %v3057, %v62
      %v3069 = vmul.f32 %v3057, %v66
      %v3070 = vmul.f32 %v3057, %v70
      %v3071 = vmul.f32 %v3057, %v74
      %v3072 = vmul.f32 %v3057, %v118
      %v3073 = vmul.f32 %v3061, %v62
      %v3074 = vmul.f32 %v3061, %v66
      %v3075 = vmul.f32 %v3061, %v70
      %v3076 = vmul.f32 %v3061, %v74
      %v3077 = vmul.f32 %v3061, %v118
      %3093 = vrot.lane.b32.xlu0 %v3063, 100
      %v3094 = vpop.permute.xlu0 %3093
      %3095 = vrot.lane.b32.xlu0 %v3064, 100
      %v3096 = vpop.permute.xlu0 %3095
      %3097 = vrot.lane.b32.xlu0 %v3065, 100
      %v3098 = vpop.permute.xlu0 %3097
      %3099 = vrot.lane.b32.xlu0 %v3066, 100
      %v3100 = vpop.permute.xlu0 %3099
      %3101 = vrot.lane.b32.xlu0 %v3067, 100
      %v3102 = vpop.permute.xlu0 %3101
      %3103 = vrot.lane.b32.xlu0 %v3068, 100
      %v3104 = vpop.permute.xlu0 %3103
      %3105 = vrot.lane.b32.xlu0 %v3069, 100
      %v3106 = vpop.permute.xlu0 %3105
      %3107 = vrot.lane.b32.xlu0 %v3070, 100
      %v3108 = vpop.permute.xlu0 %3107
      %3109 = vrot.lane.b32.xlu0 %v3071, 100
      %v3110 = vpop.permute.xlu0 %3109
      %3111 = vrot.lane.b32.xlu0 %v3072, 100
      %v3112 = vpop.permute.xlu0 %3111
      %3113 = vrot.lane.b32.xlu0 %v3073, 100
      %v3114 = vpop.permute.xlu0 %3113
      %3115 = vrot.lane.b32.xlu0 %v3074, 100
      %v3116 = vpop.permute.xlu0 %3115
      %3117 = vrot.lane.b32.xlu0 %v3075, 100
      %v3118 = vpop.permute.xlu0 %3117
      %3119 = vrot.lane.b32.xlu0 %v3076, 100
      %v3120 = vpop.permute.xlu0 %3119
      %3121 = vrot.lane.b32.xlu0 %v3077, 100
      %v3122 = vpop.permute.xlu0 %3121
      %vm3123 = vcmask 818176
      %v3124 = vsel %vm3123, %v3094, %v3096
      %v3125 = vsel %vm3123, %v3096, %v3098
      %v3126 = vsel %vm3123, %v3098, %v3100
      %v3127 = vsel %vm3123, %v3100, %v3102
      %v3128 = vsel %vm3123, %v3104, %v3106
      %v3129 = vsel %vm3123, %v3106, %v3108
      %v3130 = vsel %vm3123, %v3108, %v3110
      %v3131 = vsel %vm3123, %v3110, %v3112
      %v3132 = vsel %vm3123, %v3114, %v3116
      %v3133 = vsel %vm3123, %v3116, %v3118
      %v3134 = vsel %vm3123, %v3118, %v3120
      %v3135 = vsel %vm3123, %v3120, %v3122
      %v3148 = vadd.f32 %v3039, %v3124
      %v3149 = vadd.f32 %v3040, %v3125
      %v3150 = vadd.f32 %v3041, %v3126
      %v3151 = vadd.f32 %v3042, %v3127
      %v3152 = vadd.f32 %v3043, %v3128
      %v3153 = vadd.f32 %v3044, %v3129
      %v3154 = vadd.f32 %v3045, %v3130
      %v3155 = vadd.f32 %v3046, %v3131
      %v3156 = vadd.f32 %v3047, %v3132
      %v3157 = vadd.f32 %v3048, %v3133
      %v3158 = vadd.f32 %v3049, %v3134
      %v3159 = vadd.f32 %v3050, %v3135
      %3160 = vset.pattern.permute.xlu0 29
      %3161 = vperm.xlu0 %3160, %v28
      %v3162 = vpop.permute.xlu0 %3161
      %3164 = vset.pattern.permute.xlu0 29
      %3165 = vperm.xlu0 %3164, %v29
      %v3166 = vpop.permute.xlu0 %3165
      %3168 = vset.pattern.permute.xlu0 29
      %3169 = vperm.xlu0 %3168, %v30
      %v3170 = vpop.permute.xlu0 %3169
      %v3172 = vmul.f32 %v3162, %v62
      %v3173 = vmul.f32 %v3162, %v66
      %v3174 = vmul.f32 %v3162, %v70
      %v3175 = vmul.f32 %v3162, %v74
      %v3176 = vmul.f32 %v3162, %v118
      %v3177 = vmul.f32 %v3166, %v62
      %v3178 = vmul.f32 %v3166, %v66
      %v3179 = vmul.f32 %v3166, %v70
      %v3180 = vmul.f32 %v3166, %v74
      %v3181 = vmul.f32 %v3166, %v118
      %v3182 = vmul.f32 %v3170, %v62
      %v3183 = vmul.f32 %v3170, %v66
      %v3184 = vmul.f32 %v3170, %v70
      %v3185 = vmul.f32 %v3170, %v74
      %v3186 = vmul.f32 %v3170, %v118
      %3202 = vrot.lane.b32.xlu0 %v3172, 99
      %v3203 = vpop.permute.xlu0 %3202
      %3204 = vrot.lane.b32.xlu0 %v3173, 99
      %v3205 = vpop.permute.xlu0 %3204
      %3206 = vrot.lane.b32.xlu0 %v3174, 99
      %v3207 = vpop.permute.xlu0 %3206
      %3208 = vrot.lane.b32.xlu0 %v3175, 99
      %v3209 = vpop.permute.xlu0 %3208
      %3210 = vrot.lane.b32.xlu0 %v3176, 99
      %v3211 = vpop.permute.xlu0 %3210
      %3212 = vrot.lane.b32.xlu0 %v3177, 99
      %v3213 = vpop.permute.xlu0 %3212
      %3214 = vrot.lane.b32.xlu0 %v3178, 99
      %v3215 = vpop.permute.xlu0 %3214
      %3216 = vrot.lane.b32.xlu0 %v3179, 99
      %v3217 = vpop.permute.xlu0 %3216
      %3218 = vrot.lane.b32.xlu0 %v3180, 99
      %v3219 = vpop.permute.xlu0 %3218
      %3220 = vrot.lane.b32.xlu0 %v3181, 99
      %v3221 = vpop.permute.xlu0 %3220
      %3222 = vrot.lane.b32.xlu0 %v3182, 99
      %v3223 = vpop.permute.xlu0 %3222
      %3224 = vrot.lane.b32.xlu0 %v3183, 99
      %v3225 = vpop.permute.xlu0 %3224
      %3226 = vrot.lane.b32.xlu0 %v3184, 99
      %v3227 = vpop.permute.xlu0 %3226
      %3228 = vrot.lane.b32.xlu0 %v3185, 99
      %v3229 = vpop.permute.xlu0 %3228
      %3230 = vrot.lane.b32.xlu0 %v3186, 99
      %v3231 = vpop.permute.xlu0 %3230
      %vm3232 = vcmask 809984
      %v3233 = vsel %vm3232, %v3203, %v3205
      %v3234 = vsel %vm3232, %v3205, %v3207
      %v3235 = vsel %vm3232, %v3207, %v3209
      %v3236 = vsel %vm3232, %v3209, %v3211
      %v3237 = vsel %vm3232, %v3213, %v3215
      %v3238 = vsel %vm3232, %v3215, %v3217
      %v3239 = vsel %vm3232, %v3217, %v3219
      %v3240 = vsel %vm3232, %v3219, %v3221
      %v3241 = vsel %vm3232, %v3223, %v3225
      %v3242 = vsel %vm3232, %v3225, %v3227
      %v3243 = vsel %vm3232, %v3227, %v3229
      %v3244 = vsel %vm3232, %v3229, %v3231
      %v3257 = vadd.f32 %v3148, %v3233
      %v3258 = vadd.f32 %v3149, %v3234
      %v3259 = vadd.f32 %v3150, %v3235
      %v3260 = vadd.f32 %v3151, %v3236
      %v3261 = vadd.f32 %v3152, %v3237
      %v3262 = vadd.f32 %v3153, %v3238
      %v3263 = vadd.f32 %v3154, %v3239
      %v3264 = vadd.f32 %v3155, %v3240
      %v3265 = vadd.f32 %v3156, %v3241
      %v3266 = vadd.f32 %v3157, %v3242
      %v3267 = vadd.f32 %v3158, %v3243
      %v3268 = vadd.f32 %v3159, %v3244
      %3269 = vset.pattern.permute.xlu0 30
      %3270 = vperm.xlu0 %3269, %v28
      %v3271 = vpop.permute.xlu0 %3270
      %3273 = vset.pattern.permute.xlu0 30
      %3274 = vperm.xlu0 %3273, %v29
      %v3275 = vpop.permute.xlu0 %3274
      %3277 = vset.pattern.permute.xlu0 30
      %3278 = vperm.xlu0 %3277, %v30
      %v3279 = vpop.permute.xlu0 %3278
      %v3281 = vmul.f32 %v3271, %v62
      %v3282 = vmul.f32 %v3271, %v66
      %v3283 = vmul.f32 %v3271, %v70
      %v3284 = vmul.f32 %v3271, %v74
      %v3285 = vmul.f32 %v3271, %v118
      %v3286 = vmul.f32 %v3275, %v62
      %v3287 = vmul.f32 %v3275, %v66
      %v3288 = vmul.f32 %v3275, %v70
      %v3289 = vmul.f32 %v3275, %v74
      %v3290 = vmul.f32 %v3275, %v118
      %v3291 = vmul.f32 %v3279, %v62
      %v3292 = vmul.f32 %v3279, %v66
      %v3293 = vmul.f32 %v3279, %v70
      %v3294 = vmul.f32 %v3279, %v74
      %v3295 = vmul.f32 %v3279, %v118
      %3311 = vrot.lane.b32.xlu0 %v3281, 98
      %v3312 = vpop.permute.xlu0 %3311
      %3313 = vrot.lane.b32.xlu0 %v3282, 98
      %v3314 = vpop.permute.xlu0 %3313
      %3315 = vrot.lane.b32.xlu0 %v3283, 98
      %v3316 = vpop.permute.xlu0 %3315
      %3317 = vrot.lane.b32.xlu0 %v3284, 98
      %v3318 = vpop.permute.xlu0 %3317
      %3319 = vrot.lane.b32.xlu0 %v3285, 98
      %v3320 = vpop.permute.xlu0 %3319
      %3321 = vrot.lane.b32.xlu0 %v3286, 98
      %v3322 = vpop.permute.xlu0 %3321
      %3323 = vrot.lane.b32.xlu0 %v3287, 98
      %v3324 = vpop.permute.xlu0 %3323
      %3325 = vrot.lane.b32.xlu0 %v3288, 98
      %v3326 = vpop.permute.xlu0 %3325
      %3327 = vrot.lane.b32.xlu0 %v3289, 98
      %v3328 = vpop.permute.xlu0 %3327
      %3329 = vrot.lane.b32.xlu0 %v3290, 98
      %v3330 = vpop.permute.xlu0 %3329
      %3331 = vrot.lane.b32.xlu0 %v3291, 98
      %v3332 = vpop.permute.xlu0 %3331
      %3333 = vrot.lane.b32.xlu0 %v3292, 98
      %v3334 = vpop.permute.xlu0 %3333
      %3335 = vrot.lane.b32.xlu0 %v3293, 98
      %v3336 = vpop.permute.xlu0 %3335
      %3337 = vrot.lane.b32.xlu0 %v3294, 98
      %v3338 = vpop.permute.xlu0 %3337
      %3339 = vrot.lane.b32.xlu0 %v3295, 98
      %v3340 = vpop.permute.xlu0 %3339
      %vm3341 = vcmask 801792
      %v3342 = vsel %vm3341, %v3312, %v3314
      %v3343 = vsel %vm3341, %v3314, %v3316
      %v3344 = vsel %vm3341, %v3316, %v3318
      %v3345 = vsel %vm3341, %v3318, %v3320
      %v3346 = vsel %vm3341, %v3322, %v3324
      %v3347 = vsel %vm3341, %v3324, %v3326
      %v3348 = vsel %vm3341, %v3326, %v3328
      %v3349 = vsel %vm3341, %v3328, %v3330
      %v3350 = vsel %vm3341, %v3332, %v3334
      %v3351 = vsel %vm3341, %v3334, %v3336
      %v3352 = vsel %vm3341, %v3336, %v3338
      %v3353 = vsel %vm3341, %v3338, %v3340
      %v3366 = vadd.f32 %v3257, %v3342
      %v3367 = vadd.f32 %v3258, %v3343
      %v3368 = vadd.f32 %v3259, %v3344
      %v3369 = vadd.f32 %v3260, %v3345
      %v3370 = vadd.f32 %v3261, %v3346
      %v3371 = vadd.f32 %v3262, %v3347
      %v3372 = vadd.f32 %v3263, %v3348
      %v3373 = vadd.f32 %v3264, %v3349
      %v3374 = vadd.f32 %v3265, %v3350
      %v3375 = vadd.f32 %v3266, %v3351
      %v3376 = vadd.f32 %v3267, %v3352
      %v3377 = vadd.f32 %v3268, %v3353
      %3378 = vset.pattern.permute.xlu0 31
      %3379 = vperm.xlu0 %3378, %v28
      %v3380 = vpop.permute.xlu0 %3379
      %3382 = vset.pattern.permute.xlu0 31
      %3383 = vperm.xlu0 %3382, %v29
      %v3384 = vpop.permute.xlu0 %3383
      %3386 = vset.pattern.permute.xlu0 31
      %3387 = vperm.xlu0 %3386, %v30
      %v3388 = vpop.permute.xlu0 %3387
      %v3390 = vmul.f32 %v3380, %v62
      %v3391 = vmul.f32 %v3380, %v66
      %v3392 = vmul.f32 %v3380, %v70
      %v3393 = vmul.f32 %v3380, %v74
      %v3394 = vmul.f32 %v3380, %v118
      %v3395 = vmul.f32 %v3384, %v62
      %v3396 = vmul.f32 %v3384, %v66
      %v3397 = vmul.f32 %v3384, %v70
      %v3398 = vmul.f32 %v3384, %v74
      %v3399 = vmul.f32 %v3384, %v118
      %v3400 = vmul.f32 %v3388, %v62
      %v3401 = vmul.f32 %v3388, %v66
      %v3402 = vmul.f32 %v3388, %v70
      %v3403 = vmul.f32 %v3388, %v74
      %v3404 = vmul.f32 %v3388, %v118
      %3420 = vrot.lane.b32.xlu0 %v3390, 97
      %v3421 = vpop.permute.xlu0 %3420
      %3422 = vrot.lane.b32.xlu0 %v3391, 97
      %v3423 = vpop.permute.xlu0 %3422
      %3424 = vrot.lane.b32.xlu0 %v3392, 97
      %v3425 = vpop.permute.xlu0 %3424
      %3426 = vrot.lane.b32.xlu0 %v3393, 97
      %v3427 = vpop.permute.xlu0 %3426
      %3428 = vrot.lane.b32.xlu0 %v3394, 97
      %v3429 = vpop.permute.xlu0 %3428
      %3430 = vrot.lane.b32.xlu0 %v3395, 97
      %v3431 = vpop.permute.xlu0 %3430
      %3432 = vrot.lane.b32.xlu0 %v3396, 97
      %v3433 = vpop.permute.xlu0 %3432
      %3434 = vrot.lane.b32.xlu0 %v3397, 97
      %v3435 = vpop.permute.xlu0 %3434
      %3436 = vrot.lane.b32.xlu0 %v3398, 97
      %v3437 = vpop.permute.xlu0 %3436
      %3438 = vrot.lane.b32.xlu0 %v3399, 97
      %v3439 = vpop.permute.xlu0 %3438
      %3440 = vrot.lane.b32.xlu0 %v3400, 97
      %v3441 = vpop.permute.xlu0 %3440
      %3442 = vrot.lane.b32.xlu0 %v3401, 97
      %v3443 = vpop.permute.xlu0 %3442
      %3444 = vrot.lane.b32.xlu0 %v3402, 97
      %v3445 = vpop.permute.xlu0 %3444
      %3446 = vrot.lane.b32.xlu0 %v3403, 97
      %v3447 = vpop.permute.xlu0 %3446
      %3448 = vrot.lane.b32.xlu0 %v3404, 97
      %v3449 = vpop.permute.xlu0 %3448
      %vm3450 = vcmask 793600
      %v3451 = vsel %vm3450, %v3421, %v3423
      %v3452 = vsel %vm3450, %v3423, %v3425
      %v3453 = vsel %vm3450, %v3425, %v3427
      %v3454 = vsel %vm3450, %v3427, %v3429
      %v3455 = vsel %vm3450, %v3431, %v3433
      %v3456 = vsel %vm3450, %v3433, %v3435
      %v3457 = vsel %vm3450, %v3435, %v3437
      %v3458 = vsel %vm3450, %v3437, %v3439
      %v3459 = vsel %vm3450, %v3441, %v3443
      %v3460 = vsel %vm3450, %v3443, %v3445
      %v3461 = vsel %vm3450, %v3445, %v3447
      %v3462 = vsel %vm3450, %v3447, %v3449
      %v3475 = vadd.f32 %v3366, %v3451
      %v3476 = vadd.f32 %v3367, %v3452
      %v3477 = vadd.f32 %v3368, %v3453
      %v3478 = vadd.f32 %v3369, %v3454
      %v3479 = vadd.f32 %v3370, %v3455
      %v3480 = vadd.f32 %v3371, %v3456
      %v3481 = vadd.f32 %v3372, %v3457
      %v3482 = vadd.f32 %v3373, %v3458
      %v3483 = vadd.f32 %v3374, %v3459
      %v3484 = vadd.f32 %v3375, %v3460
      %v3485 = vadd.f32 %v3376, %v3461
      %v3486 = vadd.f32 %v3377, %v3462
      %3487 = vset.pattern.permute.xlu0 32
      %3488 = vperm.xlu0 %3487, %v28
      %v3489 = vpop.permute.xlu0 %3488
      %3491 = vset.pattern.permute.xlu0 32
      %3492 = vperm.xlu0 %3491, %v29
      %v3493 = vpop.permute.xlu0 %3492
      %3495 = vset.pattern.permute.xlu0 32
      %3496 = vperm.xlu0 %3495, %v30
      %v3497 = vpop.permute.xlu0 %3496
      %v3499 = vmul.f32 %v3489, %v62
      %v3500 = vmul.f32 %v3489, %v66
      %v3501 = vmul.f32 %v3489, %v70
      %v3502 = vmul.f32 %v3489, %v74
      %v3503 = vmul.f32 %v3489, %v118
      %v3504 = vmul.f32 %v3493, %v62
      %v3505 = vmul.f32 %v3493, %v66
      %v3506 = vmul.f32 %v3493, %v70
      %v3507 = vmul.f32 %v3493, %v74
      %v3508 = vmul.f32 %v3493, %v118
      %v3509 = vmul.f32 %v3497, %v62
      %v3510 = vmul.f32 %v3497, %v66
      %v3511 = vmul.f32 %v3497, %v70
      %v3512 = vmul.f32 %v3497, %v74
      %v3513 = vmul.f32 %v3497, %v118
      %3529 = vrot.lane.b32.xlu0 %v3499, 96
      %v3530 = vpop.permute.xlu0 %3529
      %3531 = vrot.lane.b32.xlu0 %v3500, 96
      %v3532 = vpop.permute.xlu0 %3531
      %3533 = vrot.lane.b32.xlu0 %v3501, 96
      %v3534 = vpop.permute.xlu0 %3533
      %3535 = vrot.lane.b32.xlu0 %v3502, 96
      %v3536 = vpop.permute.xlu0 %3535
      %3537 = vrot.lane.b32.xlu0 %v3503, 96
      %v3538 = vpop.permute.xlu0 %3537
      %3539 = vrot.lane.b32.xlu0 %v3504, 96
      %v3540 = vpop.permute.xlu0 %3539
      %3541 = vrot.lane.b32.xlu0 %v3505, 96
      %v3542 = vpop.permute.xlu0 %3541
      %3543 = vrot.lane.b32.xlu0 %v3506, 96
      %v3544 = vpop.permute.xlu0 %3543
      %3545 = vrot.lane.b32.xlu0 %v3507, 96
      %v3546 = vpop.permute.xlu0 %3545
      %3547 = vrot.lane.b32.xlu0 %v3508, 96
      %v3548 = vpop.permute.xlu0 %3547
      %3549 = vrot.lane.b32.xlu0 %v3509, 96
      %v3550 = vpop.permute.xlu0 %3549
      %3551 = vrot.lane.b32.xlu0 %v3510, 96
      %v3552 = vpop.permute.xlu0 %3551
      %3553 = vrot.lane.b32.xlu0 %v3511, 96
      %v3554 = vpop.permute.xlu0 %3553
      %3555 = vrot.lane.b32.xlu0 %v3512, 96
      %v3556 = vpop.permute.xlu0 %3555
      %3557 = vrot.lane.b32.xlu0 %v3513, 96
      %v3558 = vpop.permute.xlu0 %3557
      %vm3559 = vcmask 785408
      %v3560 = vsel %vm3559, %v3530, %v3532
      %v3561 = vsel %vm3559, %v3532, %v3534
      %v3562 = vsel %vm3559, %v3534, %v3536
      %v3563 = vsel %vm3559, %v3536, %v3538
      %v3564 = vsel %vm3559, %v3540, %v3542
      %v3565 = vsel %vm3559, %v3542, %v3544
      %v3566 = vsel %vm3559, %v3544, %v3546
      %v3567 = vsel %vm3559, %v3546, %v3548
      %v3568 = vsel %vm3559, %v3550, %v3552
      %v3569 = vsel %vm3559, %v3552, %v3554
      %v3570 = vsel %vm3559, %v3554, %v3556
      %v3571 = vsel %vm3559, %v3556, %v3558
      %v3584 = vadd.f32 %v3475, %v3560
      %v3585 = vadd.f32 %v3476, %v3561
      %v3586 = vadd.f32 %v3477, %v3562
      %v3587 = vadd.f32 %v3478, %v3563
      %v3588 = vadd.f32 %v3479, %v3564
      %v3589 = vadd.f32 %v3480, %v3565
      %v3590 = vadd.f32 %v3481, %v3566
      %v3591 = vadd.f32 %v3482, %v3567
      %v3592 = vadd.f32 %v3483, %v3568
      %v3593 = vadd.f32 %v3484, %v3569
      %v3594 = vadd.f32 %v3485, %v3570
      %v3595 = vadd.f32 %v3486, %v3571
      %3596 = vset.pattern.permute.xlu0 33
      %3597 = vperm.xlu0 %3596, %v28
      %v3598 = vpop.permute.xlu0 %3597
      %3600 = vset.pattern.permute.xlu0 33
      %3601 = vperm.xlu0 %3600, %v29
      %v3602 = vpop.permute.xlu0 %3601
      %3604 = vset.pattern.permute.xlu0 33
      %3605 = vperm.xlu0 %3604, %v30
      %v3606 = vpop.permute.xlu0 %3605
      %v3608 = vmul.f32 %v3598, %v62
      %v3609 = vmul.f32 %v3598, %v66
      %v3610 = vmul.f32 %v3598, %v70
      %v3611 = vmul.f32 %v3598, %v74
      %v3612 = vmul.f32 %v3598, %v118
      %v3613 = vmul.f32 %v3602, %v62
      %v3614 = vmul.f32 %v3602, %v66
      %v3615 = vmul.f32 %v3602, %v70
      %v3616 = vmul.f32 %v3602, %v74
      %v3617 = vmul.f32 %v3602, %v118
      %v3618 = vmul.f32 %v3606, %v62
      %v3619 = vmul.f32 %v3606, %v66
      %v3620 = vmul.f32 %v3606, %v70
      %v3621 = vmul.f32 %v3606, %v74
      %v3622 = vmul.f32 %v3606, %v118
      %3638 = vrot.lane.b32.xlu0 %v3608, 95
      %v3639 = vpop.permute.xlu0 %3638
      %3640 = vrot.lane.b32.xlu0 %v3609, 95
      %v3641 = vpop.permute.xlu0 %3640
      %3642 = vrot.lane.b32.xlu0 %v3610, 95
      %v3643 = vpop.permute.xlu0 %3642
      %3644 = vrot.lane.b32.xlu0 %v3611, 95
      %v3645 = vpop.permute.xlu0 %3644
      %3646 = vrot.lane.b32.xlu0 %v3612, 95
      %v3647 = vpop.permute.xlu0 %3646
      %3648 = vrot.lane.b32.xlu0 %v3613, 95
      %v3649 = vpop.permute.xlu0 %3648
      %3650 = vrot.lane.b32.xlu0 %v3614, 95
      %v3651 = vpop.permute.xlu0 %3650
      %3652 = vrot.lane.b32.xlu0 %v3615, 95
      %v3653 = vpop.permute.xlu0 %3652
      %3654 = vrot.lane.b32.xlu0 %v3616, 95
      %v3655 = vpop.permute.xlu0 %3654
      %3656 = vrot.lane.b32.xlu0 %v3617, 95
      %v3657 = vpop.permute.xlu0 %3656
      %3658 = vrot.lane.b32.xlu0 %v3618, 95
      %v3659 = vpop.permute.xlu0 %3658
      %3660 = vrot.lane.b32.xlu0 %v3619, 95
      %v3661 = vpop.permute.xlu0 %3660
      %3662 = vrot.lane.b32.xlu0 %v3620, 95
      %v3663 = vpop.permute.xlu0 %3662
      %3664 = vrot.lane.b32.xlu0 %v3621, 95
      %v3665 = vpop.permute.xlu0 %3664
      %3666 = vrot.lane.b32.xlu0 %v3622, 95
      %v3667 = vpop.permute.xlu0 %3666
      %vm3668 = vcmask 777216
      %v3669 = vsel %vm3668, %v3639, %v3641
      %v3670 = vsel %vm3668, %v3641, %v3643
      %v3671 = vsel %vm3668, %v3643, %v3645
      %v3672 = vsel %vm3668, %v3645, %v3647
      %v3673 = vsel %vm3668, %v3649, %v3651
      %v3674 = vsel %vm3668, %v3651, %v3653
      %v3675 = vsel %vm3668, %v3653, %v3655
      %v3676 = vsel %vm3668, %v3655, %v3657
      %v3677 = vsel %vm3668, %v3659, %v3661
      %v3678 = vsel %vm3668, %v3661, %v3663
      %v3679 = vsel %vm3668, %v3663, %v3665
      %v3680 = vsel %vm3668, %v3665, %v3667
      %v3693 = vadd.f32 %v3584, %v3669
      %v3694 = vadd.f32 %v3585, %v3670
      %v3695 = vadd.f32 %v3586, %v3671
      %v3696 = vadd.f32 %v3587, %v3672
      %v3697 = vadd.f32 %v3588, %v3673
      %v3698 = vadd.f32 %v3589, %v3674
      %v3699 = vadd.f32 %v3590, %v3675
      %v3700 = vadd.f32 %v3591, %v3676
      %v3701 = vadd.f32 %v3592, %v3677
      %v3702 = vadd.f32 %v3593, %v3678
      %v3703 = vadd.f32 %v3594, %v3679
      %v3704 = vadd.f32 %v3595, %v3680
      %v3705 = vmax.f32 %v3693, %v3694
      %v3706 = vmax.f32 %v3697, %v3698
      %v3707 = vmax.f32 %v3701, %v3702
      %v3708 = vmax.f32 %v3705, %v3695
      %v3709 = vmax.f32 %v3706, %v3699
      %v3710 = vmax.f32 %v3707, %v3703
      %v3711 = vmax.f32 %v3708, %v3696
      %v3712 = vmax.f32 %v3709, %v3700
      %v3713 = vmax.f32 %v3710, %v3704
      %3714 = vmax.xlane.f32.xlu0 %v3711
      %v3715 = vpop.xlane.xlu0 %3714
      %3716 = vmax.xlane.f32.xlu0 %v3712
      %v3717 = vpop.xlane.xlu0 %3716
      %vm3718 = vcmask 1043456
      %v3719 = vsel %vm3718, %v3713, -inf
      %3720 = vmax.xlane.f32.xlu0 %v3719
      %v3721 = vpop.xlane.xlu0 %3720
      %v3722 = vadd.f32 %v3715, %v31
      %v3723 = vadd.f32 %v3717, %v32
      %v3724 = vadd.f32 %v3721, %v33
      %s3725 = smul.u32 %s35, 24
      %s3726 = scalar_lea.vmem %s3, %s3725
      %vm3727 = vcmask 7168
      %3728 = vst.msk [vmem:[%s3726] sm:$0xff] %vm3727, %v3722
      %3729 = vst.msk [vmem:[%s3726 + $0x8] sm:$0xff] %vm3727, %v3723
      %vm3730 = vcmask 3072
      %3731 = vst.msk [vmem:[%s3726 + $0x10] sm:$0xf] %vm3730, %v3724
    $region22: #{tpu_custom_call.1} parent=1 // loop_footer
      %s39 = sadd.s32 1, %s35
    $region23: #{tpu_custom_call.1} parent=1 // loop_footer_branch
      %34 = sbr.rel target = $region19
    $region24: #{tpu_custom_call.1} parent=1 // loop_exit
      _
    // Predicated region
    $region25: #{tpu_custom_call.1} parent=1 // pred_check
      _
    $region26: #{tpu_custom_call.1} parent=1 // pred_check_branch
      %3733 = sbr.rel (0) target = $region28
    $region27: #{tpu_custom_call.1} parent=1 // pred_region
      _
    $region28: #{tpu_custom_call.1} parent=1 // pred_fallthru
      _
    // Predicated region
    $region29: #{tpu_custom_call.1} parent=1 // pred_check
      _
    $region30: #{tpu_custom_call.1} parent=1 // pred_check_branch
      %3735 = sbr.rel (0) target = $region32
    $region31: #{tpu_custom_call.1} parent=1 // pred_region
      _
    $region32: #{tpu_custom_call.1} parent=1 // pred_fallthru
      _
    %3736 = vsyncpa [#allocation3], 1

</llo_original>
